<compile_context>
chip_gen: v7x
topology: tpu7x:2x2x1
jax: 0.10.0
libtpu: 0.0.40
codegen_flags: <defaults>
</compile_context>

<pallas_src>
import functools

import jax
import jax.numpy as jnp
from jax.experimental import pallas as pl
from jax.experimental.pallas import tpu as pltpu

LN_EPS = 1e-6


# ------------------------------ fused kernel --------------------------------

def _attentive_block_kernel(xq_ref, xkv_ref, pq_ref, pk_ref,
                            ln_ref, wqkv_ref, wproj_ref, bproj_ref,
                            o_ref, k_buf, v_buf, *, num_heads):
    """One (batch, query-tile) step of the whole AttentiveBlock forward.

    xq_ref   : (1, TQ, C)   query tokens
    xkv_ref  : (1, Nk, C)   key/value tokens
    pq_ref   : (1, TQ, C)   query positional embedding
    pk_ref   : (1, Nk, C)   key positional embedding
    ln_ref   : (6, C) f32   rows = [g_q, b_q, g_k, b_k, g_v, b_v]
    wqkv_ref : (3, C, C) bf16   [Wq * scale, Wk, Wv]  ((in, out) oriented)
    wproj_ref: (C, C) bf16  output projection weight
    bproj_ref: (1, C) f32   output projection bias
    o_ref    : (1, TQ, C)
    k_buf/v_buf : (Nk, C) bf16 persistent VMEM scratch (projected K / V)
    """
    C = wproj_ref.shape[0]
    hd = C // num_heads

    def layernorm(x, g, b):
        x = x.astype(jnp.float32)                       # stats in f32
        mu = jnp.mean(x, axis=-1, keepdims=True)
        var = jnp.mean(jnp.square(x - mu), axis=-1, keepdims=True)
        return (x - mu) * jax.lax.rsqrt(var + LN_EPS) * g + b

    # ---- K/V path: computed ONCE per batch row (first query tile primes it) ----
    @pl.when(pl.program_id(1) == 0)
    def _():
        xkv = xkv_ref[0]                                # (Nk, C)
        k_in = layernorm(xkv + pk_ref[0],
                         ln_ref[2:3, :], ln_ref[3:4, :]).astype(jnp.bfloat16)
        v_in = layernorm(xkv,
                         ln_ref[4:5, :], ln_ref[5:6, :]).astype(jnp.bfloat16)
        k_buf[...] = jnp.dot(k_in, wqkv_ref[1],
                             preferred_element_type=jnp.float32).astype(jnp.bfloat16)
        v_buf[...] = jnp.dot(v_in, wqkv_ref[2],
                             preferred_element_type=jnp.float32).astype(jnp.bfloat16)

    # ---- Q path: per query tile ----
    q_in = layernorm(xq_ref[0] + pq_ref[0],
                     ln_ref[0:1, :], ln_ref[1:2, :]).astype(jnp.bfloat16)
    # head_dim**-0.5 is pre-folded into wqkv_ref[0] by the wrapper.
    q = jnp.dot(q_in, wqkv_ref[0],
                preferred_element_type=jnp.float32).astype(jnp.bfloat16)

    k = k_buf[...]                                      # (Nk, C) bf16
    v = v_buf[...]                                      # (Nk, C) bf16

    # ---- Per-head attention; output projection accumulated per head ----
    acc = None
    for h in range(num_heads):
        lo, hi = h * hd, (h + 1) * hd
        qh, kh, vh = q[:, lo:hi], k[:, lo:hi], v[:, lo:hi]
        # q @ k^T without explicit transpose (contract on last dims), bf16 MXU inputs.
        logits = jax.lax.dot_general(qh, kh, (((1,), (1,)), ((), ())),
                                     preferred_element_type=jnp.float32)  # (TQ, Nk)
        m = jnp.max(logits, axis=-1, keepdims=True)
        e = jnp.exp(logits - m)                         # f32 (v5e has no bf16 EUP)
        denom = jnp.sum(e, axis=-1, keepdims=True)
        p = (e * pl.reciprocal(denom, approx=True)).astype(jnp.bfloat16)
        ctx_h = jnp.dot(p, vh,
                        preferred_element_type=jnp.float32).astype(jnp.bfloat16)
        contrib = jnp.dot(ctx_h, wproj_ref[lo:hi, :],   # sublane row-slice of Wproj
                          preferred_element_type=jnp.float32)
        acc = contrib if acc is None else acc + contrib

    o_ref[0] = (acc + bproj_ref[...]).astype(o_ref.dtype)


@functools.partial(jax.jit, static_argnames=("num_heads",))
def attentive_block_forward(x_q, x_kv, pos_q, pos_k, params, num_heads):
    """AttentiveBlock forward.  x_q/pos_q: (B, Nq, C), x_kv/pos_k: (B, Nk, C)."""
    B, Nq, C = x_q.shape
    Nk = x_kv.shape[1]
    hd = C // num_heads
    assert hd * num_heads == C
    scale = hd ** -0.5

    TQ = Nq if Nq <= 256 else 256
    assert Nq % TQ == 0, "query length must tile by TQ"
    grid = (B, Nq // TQ)

    # Fold the q scale into Wq, then keep all matmul weights in bf16 (native MXU
    # input dtype; halves their HBM->VMEM bytes). LN params / bias stay f32.
    scales = jnp.array([scale, 1.0, 1.0], jnp.float32)[:, None, None]
    w_qkv = (params["w_qkv"].astype(jnp.float32) * scales).astype(jnp.bfloat16)
    w_proj = params["w_proj"].astype(jnp.bfloat16)
    ln = params["ln"].astype(jnp.float32)
    b_proj = params["b_proj"].astype(jnp.float32)

    kernel = functools.partial(_attentive_block_kernel, num_heads=num_heads)

    return pl.pallas_call(
        kernel,
        out_shape=jax.ShapeDtypeStruct((B, Nq, C), x_q.dtype),
        grid=grid,
        in_specs=[
            pl.BlockSpec((1, TQ, C), lambda b, i: (b, i, 0)),   # x_q
            pl.BlockSpec((1, Nk, C), lambda b, i: (b, 0, 0)),   # x_kv
            pl.BlockSpec((1, TQ, C), lambda b, i: (b, i, 0)),   # pos_q
            pl.BlockSpec((1, Nk, C), lambda b, i: (b, 0, 0)),   # pos_k
            pl.BlockSpec((6, C), lambda b, i: (0, 0)),          # LN gammas/betas (f32)
            pl.BlockSpec((3, C, C), lambda b, i: (0, 0, 0)),    # Wq*scale / Wk / Wv (bf16)
            pl.BlockSpec((C, C), lambda b, i: (0, 0)),          # Wproj (bf16)
            pl.BlockSpec((1, C), lambda b, i: (0, 0)),          # bproj (f32)
        ],
        out_specs=pl.BlockSpec((1, TQ, C), lambda b, i: (b, i, 0)),
        scratch_shapes=[
            pltpu.VMEM((Nk, C), jnp.bfloat16),                  # projected K
            pltpu.VMEM((Nk, C), jnp.bfloat16),                  # projected V
        ],
        compiler_params=pltpu.CompilerParams(
            # batch axis parallel (megacore); query-tile axis arbitrary so the
            # per-batch K/V priming at program_id(1)==0 is well-defined.
            dimension_semantics=("parallel", "arbitrary"),
            vmem_limit_bytes=48 * 1024 * 1024,
        ),
    )(x_q, x_kv, pos_q, pos_k, ln, w_qkv, w_proj, b_proj)


# --------------------------- plain-JAX reference -----------------------------

def reference_forward(x_q, x_kv, pos_q, pos_k, params, num_heads):
    def layernorm(x, g, b):
        mu = jnp.mean(x, axis=-1, keepdims=True)
        var = jnp.mean(jnp.square(x - mu), axis=-1, keepdims=True)
        return (x - mu) / jnp.sqrt(var + LN_EPS) * g + b

    B, Nq, C = x_q.shape
    Nk = x_kv.shape[1]
    hd = C // num_heads
    ln = params["ln"]
    q_in = layernorm(x_q + pos_q, ln[0], ln[1])
    k_in = layernorm(x_kv + pos_k, ln[2], ln[3])
    v_in = layernorm(x_kv, ln[4], ln[5])
    q = q_in @ params["w_qkv"][0]
    k = k_in @ params["w_qkv"][1]
    v = v_in @ params["w_qkv"][2]
    qh = q.reshape(B, Nq, num_heads, hd).transpose(0, 2, 1, 3) * hd ** -0.5
    kh = k.reshape(B, Nk, num_heads, hd).transpose(0, 2, 1, 3)
    vh = v.reshape(B, Nk, num_heads, hd).transpose(0, 2, 1, 3)
    attn = jax.nn.softmax(qh @ kh.transpose(0, 1, 3, 2), axis=-1)
    ctx = (attn @ vh).transpose(0, 2, 1, 3).reshape(B, Nq, C)
    return ctx @ params["w_proj"] + params["b_proj"]


# --------------------------------- main --------------------------------------

if __name__ == "__main__":
    B, Nq, Nk, C, num_heads = 2, 16, 32, 128, 4

    root = jax.random.PRNGKey(0)
    keys = jax.random.split(root, 12)

    x_q = jax.random.normal(keys[0], (B, Nq, C), jnp.float32)
    x_kv = jax.random.normal(keys[1], (B, Nk, C), jnp.float32)
    pos_q = 0.1 * jax.random.normal(keys[2], (B, Nq, C), jnp.float32)
    pos_k = 0.1 * jax.random.normal(keys[3], (B, Nk, C), jnp.float32)

    def gamma(k):
        return 1.0 + 0.1 * jax.random.normal(k, (C,), jnp.float32)

    def beta(k):
        return 0.02 * jax.random.normal(k, (C,), jnp.float32)

    ln = jnp.stack([gamma(keys[4]), beta(keys[5]),
                    gamma(keys[6]), beta(keys[7]),
                    gamma(keys[8]), beta(keys[9])], axis=0)          # (6, C)
    w_qkv = 0.05 * jax.random.normal(keys[10], (3, C, C), jnp.float32)
    kp, kb = jax.random.split(keys[11])
    w_proj = 0.05 * jax.random.normal(kp, (C, C), jnp.float32)
    b_proj = 0.02 * jax.random.normal(kb, (1, C), jnp.float32)

    params = {"ln": ln, "w_qkv": w_qkv, "w_proj": w_proj, "b_proj": b_proj}

    out = attentive_block_forward(x_q, x_kv, pos_q, pos_k, params, num_heads=num_heads)
    jax.block_until_ready(out)

    ref = reference_forward(x_q, x_kv, pos_q, pos_k, params, num_heads)
    max_err = float(jnp.max(jnp.abs(out - ref)))

    assert out.shape == (B, Nq, C), out.shape
    # bf16 MXU inputs (weights + activations) vs. the f32 reference.
    assert max_err < 3e-2, f"max abs err vs reference: {max_err}"
    print("KERNEL_OK")
</pallas_src>

<mosaic_0001>
module attributes {stable_mosaic.version = 11 : i64} {
  func.func @_attentive_block_kernel(%arg0: i32, %arg1: i32, %arg2: memref<1x16x128xf32, #tpu.memory_space<vmem>>, %arg3: memref<1x32x128xf32, #tpu.memory_space<vmem>>, %arg4: memref<1x16x128xf32, #tpu.memory_space<vmem>>, %arg5: memref<1x32x128xf32, #tpu.memory_space<vmem>>, %arg6: memref<6x128xf32, #tpu.memory_space<vmem>>, %arg7: memref<3x128x128xbf16, #tpu.memory_space<vmem>>, %arg8: memref<128x128xbf16, #tpu.memory_space<vmem>>, %arg9: memref<1x128xf32, #tpu.memory_space<vmem>>, %arg10: memref<1x16x128xf32, #tpu.memory_space<vmem>>, %arg11: memref<32x128xbf16, #tpu.memory_space<vmem>>, %arg12: memref<32x128xbf16, #tpu.memory_space<vmem>>) attributes {dimension_semantics = [#tpu.dimension_semantics<parallel>, #tpu.dimension_semantics<arbitrary>], iteration_bounds = array<i64: 2, 1>, scalar_prefetch = 0 : i64, scratch_operands = 2 : i64, tpu.core_type = #tpu.core_type<tc>, window_params = [{transform_indices = @transform_0, window_bounds = array<i64: 1, 16, 128>}, {transform_indices = @transform_1, window_bounds = array<i64: 1, 32, 128>}, {transform_indices = @transform_2, window_bounds = array<i64: 1, 16, 128>}, {transform_indices = @transform_3, window_bounds = array<i64: 1, 32, 128>}, {pipeline_mode = #tpu.pipeline_mode<synchronous>, transform_indices = @transform_4, window_bounds = array<i64: 6, 128>}, {pipeline_mode = #tpu.pipeline_mode<synchronous>, transform_indices = @transform_5, window_bounds = array<i64: 3, 128, 128>}, {pipeline_mode = #tpu.pipeline_mode<synchronous>, transform_indices = @transform_6, window_bounds = array<i64: 128, 128>}, {pipeline_mode = #tpu.pipeline_mode<synchronous>, transform_indices = @transform_7, window_bounds = array<i64: 1, 128>}, {transform_indices = @transform_8, window_bounds = array<i64: 1, 16, 128>}]} {
    %c0_i32 = arith.constant 0 : i32
    %0 = arith.cmpi eq, %arg1, %c0_i32 : i32
    %1 = arith.extui %0 : i1 to i32
    %c0_i32_0 = arith.constant 0 : i32
    %2 = arith.cmpi ne, %1, %c0_i32_0 : i32
    scf.if %2 {
      %c0_51 = arith.constant 0 : index
      %c0_52 = arith.constant 0 : index
      %c0_53 = arith.constant 0 : index
      %124 = vector.load %arg3[%c0_51, %c0_52, %c0_53] : memref<1x32x128xf32, #tpu.memory_space<vmem>>, vector<1x32x128xf32>
      %125 = vector.shape_cast %124 : vector<1x32x128xf32> to vector<32x128xf32>
      %c0_54 = arith.constant 0 : index
      %c0_55 = arith.constant 0 : index
      %c0_56 = arith.constant 0 : index
      %126 = vector.load %arg5[%c0_54, %c0_55, %c0_56] : memref<1x32x128xf32, #tpu.memory_space<vmem>>, vector<1x32x128xf32>
      %127 = vector.shape_cast %126 : vector<1x32x128xf32> to vector<32x128xf32>
      %128 = arith.addf %125, %127 : vector<32x128xf32>
      %c2 = arith.constant 2 : index
      %c0_57 = arith.constant 0 : index
      %129 = vector.load %arg6[%c2, %c0_57] : memref<6x128xf32, #tpu.memory_space<vmem>>, vector<1x128xf32>
      %c3 = arith.constant 3 : index
      %c0_58 = arith.constant 0 : index
      %130 = vector.load %arg6[%c3, %c0_58] : memref<6x128xf32, #tpu.memory_space<vmem>>, vector<1x128xf32>
      %cst_59 = arith.constant dense<0.000000e+00> : vector<32xf32>
      %131 = vector.multi_reduction <add>, %128, %cst_59 [1] : vector<32x128xf32> to vector<32xf32>
      %132 = vector.shape_cast %131 : vector<32xf32> to vector<32x1xf32>
      %cst_60 = arith.constant 1.280000e+02 : f32
      %133 = vector.broadcast %cst_60 : f32 to vector<32x1xf32>
      %134 = arith.divf %132, %133 : vector<32x1xf32>
      %135 = vector.broadcast %134 : vector<32x1xf32> to vector<32x128xf32>
      %136 = arith.subf %128, %135 : vector<32x128xf32>
      %137 = arith.mulf %136, %136 : vector<32x128xf32>
      %cst_61 = arith.constant dense<0.000000e+00> : vector<32xf32>
      %138 = vector.multi_reduction <add>, %137, %cst_61 [1] : vector<32x128xf32> to vector<32xf32>
      %139 = vector.shape_cast %138 : vector<32xf32> to vector<32x1xf32>
      %cst_62 = arith.constant 1.280000e+02 : f32
      %140 = vector.broadcast %cst_62 : f32 to vector<32x1xf32>
      %141 = arith.divf %139, %140 : vector<32x1xf32>
      %142 = vector.broadcast %134 : vector<32x1xf32> to vector<32x128xf32>
      %143 = arith.subf %128, %142 : vector<32x128xf32>
      %cst_63 = arith.constant 9.99999997E-7 : f32
      %144 = vector.broadcast %cst_63 : f32 to vector<32x1xf32>
      %145 = arith.addf %141, %144 : vector<32x1xf32>
      %146 = math.rsqrt %145 : vector<32x1xf32>
      %147 = vector.broadcast %146 : vector<32x1xf32> to vector<32x128xf32>
      %148 = arith.mulf %143, %147 : vector<32x128xf32>
      %149 = vector.broadcast %129 : vector<1x128xf32> to vector<32x128xf32>
      %150 = arith.mulf %148, %149 : vector<32x128xf32>
      %151 = vector.broadcast %130 : vector<1x128xf32> to vector<32x128xf32>
      %152 = arith.addf %150, %151 : vector<32x128xf32>
      %153 = arith.truncf %152 : vector<32x128xf32> to vector<32x128xbf16>
      %c4 = arith.constant 4 : index
      %c0_64 = arith.constant 0 : index
      %154 = vector.load %arg6[%c4, %c0_64] : memref<6x128xf32, #tpu.memory_space<vmem>>, vector<1x128xf32>
      %c5 = arith.constant 5 : index
      %c0_65 = arith.constant 0 : index
      %155 = vector.load %arg6[%c5, %c0_65] : memref<6x128xf32, #tpu.memory_space<vmem>>, vector<1x128xf32>
      %cst_66 = arith.constant dense<0.000000e+00> : vector<32xf32>
      %156 = vector.multi_reduction <add>, %125, %cst_66 [1] : vector<32x128xf32> to vector<32xf32>
      %157 = vector.shape_cast %156 : vector<32xf32> to vector<32x1xf32>
      %cst_67 = arith.constant 1.280000e+02 : f32
      %158 = vector.broadcast %cst_67 : f32 to vector<32x1xf32>
      %159 = arith.divf %157, %158 : vector<32x1xf32>
      %160 = vector.broadcast %159 : vector<32x1xf32> to vector<32x128xf32>
      %161 = arith.subf %125, %160 : vector<32x128xf32>
      %162 = arith.mulf %161, %161 : vector<32x128xf32>
      %cst_68 = arith.constant dense<0.000000e+00> : vector<32xf32>
      %163 = vector.multi_reduction <add>, %162, %cst_68 [1] : vector<32x128xf32> to vector<32xf32>
      %164 = vector.shape_cast %163 : vector<32xf32> to vector<32x1xf32>
      %cst_69 = arith.constant 1.280000e+02 : f32
      %165 = vector.broadcast %cst_69 : f32 to vector<32x1xf32>
      %166 = arith.divf %164, %165 : vector<32x1xf32>
      %167 = vector.broadcast %159 : vector<32x1xf32> to vector<32x128xf32>
      %168 = arith.subf %125, %167 : vector<32x128xf32>
      %cst_70 = arith.constant 9.99999997E-7 : f32
      %169 = vector.broadcast %cst_70 : f32 to vector<32x1xf32>
      %170 = arith.addf %166, %169 : vector<32x1xf32>
      %171 = math.rsqrt %170 : vector<32x1xf32>
      %172 = vector.broadcast %171 : vector<32x1xf32> to vector<32x128xf32>
      %173 = arith.mulf %168, %172 : vector<32x128xf32>
      %174 = vector.broadcast %154 : vector<1x128xf32> to vector<32x128xf32>
      %175 = arith.mulf %173, %174 : vector<32x128xf32>
      %176 = vector.broadcast %155 : vector<1x128xf32> to vector<32x128xf32>
      %177 = arith.addf %175, %176 : vector<32x128xf32>
      %178 = arith.truncf %177 : vector<32x128xf32> to vector<32x128xbf16>
      %c1_71 = arith.constant 1 : index
      %c0_72 = arith.constant 0 : index
      %c0_73 = arith.constant 0 : index
      %179 = vector.load %arg7[%c1_71, %c0_72, %c0_73] : memref<3x128x128xbf16, #tpu.memory_space<vmem>>, vector<1x128x128xbf16>
      %180 = vector.shape_cast %179 : vector<1x128x128xbf16> to vector<128x128xbf16>
      %cst_74 = arith.constant dense<0.000000e+00> : vector<32x128xf32>
      %181 = tpu.matmul %153, %180, %cst_74 {dimension_numbers = #tpu.dot_dimension_numbers<[1], [0], [0], [1], [0, 0, 1, 1], [], []>} : vector<32x128xbf16>, vector<128x128xbf16>, vector<32x128xf32> -> vector<32x128xf32>
      %182 = arith.truncf %181 : vector<32x128xf32> to vector<32x128xbf16>
      %c0_75 = arith.constant 0 : index
      %c0_76 = arith.constant 0 : index
      %183 = vector.load %arg11[%c0_75, %c0_76] : memref<32x128xbf16, #tpu.memory_space<vmem>>, vector<32x128xbf16>
      tpu.vector_store %arg11[%c0_75, %c0_76], %182 {strides = array<i32>} : memref<32x128xbf16, #tpu.memory_space<vmem>>, vector<32x128xbf16>,
      %c2_77 = arith.constant 2 : index
      %c0_78 = arith.constant 0 : index
      %c0_79 = arith.constant 0 : index
      %184 = vector.load %arg7[%c2_77, %c0_78, %c0_79] : memref<3x128x128xbf16, #tpu.memory_space<vmem>>, vector<1x128x128xbf16>
      %185 = vector.shape_cast %184 : vector<1x128x128xbf16> to vector<128x128xbf16>
      %cst_80 = arith.constant dense<0.000000e+00> : vector<32x128xf32>
      %186 = tpu.matmul %178, %185, %cst_80 {dimension_numbers = #tpu.dot_dimension_numbers<[1], [0], [0], [1], [0, 0, 1, 1], [], []>} : vector<32x128xbf16>, vector<128x128xbf16>, vector<32x128xf32> -> vector<32x128xf32>
      %187 = arith.truncf %186 : vector<32x128xf32> to vector<32x128xbf16>
      %c0_81 = arith.constant 0 : index
      %c0_82 = arith.constant 0 : index
      %188 = vector.load %arg12[%c0_81, %c0_82] : memref<32x128xbf16, #tpu.memory_space<vmem>>, vector<32x128xbf16>
      tpu.vector_store %arg12[%c0_81, %c0_82], %187 {strides = array<i32>} : memref<32x128xbf16, #tpu.memory_space<vmem>>, vector<32x128xbf16>,
    } else {
    }
    %c0 = arith.constant 0 : index
    %c0_1 = arith.constant 0 : index
    %c0_2 = arith.constant 0 : index
    %3 = vector.load %arg2[%c0, %c0_1, %c0_2] : memref<1x16x128xf32, #tpu.memory_space<vmem>>, vector<1x16x128xf32>
    %4 = vector.shape_cast %3 : vector<1x16x128xf32> to vector<16x128xf32>
    %c0_3 = arith.constant 0 : index
    %c0_4 = arith.constant 0 : index
    %c0_5 = arith.constant 0 : index
    %5 = vector.load %arg4[%c0_3, %c0_4, %c0_5] : memref<1x16x128xf32, #tpu.memory_space<vmem>>, vector<1x16x128xf32>
    %6 = vector.shape_cast %5 : vector<1x16x128xf32> to vector<16x128xf32>
    %7 = arith.addf %4, %6 : vector<16x128xf32>
    %c0_6 = arith.constant 0 : index
    %c0_7 = arith.constant 0 : index
    %8 = vector.load %arg6[%c0_6, %c0_7] : memref<6x128xf32, #tpu.memory_space<vmem>>, vector<1x128xf32>
    %c1 = arith.constant 1 : index
    %c0_8 = arith.constant 0 : index
    %9 = vector.load %arg6[%c1, %c0_8] : memref<6x128xf32, #tpu.memory_space<vmem>>, vector<1x128xf32>
    %cst = arith.constant dense<0.000000e+00> : vector<16xf32>
    %10 = vector.multi_reduction <add>, %7, %cst [1] : vector<16x128xf32> to vector<16xf32>
    %11 = vector.shape_cast %10 : vector<16xf32> to vector<16x1xf32>
    %cst_9 = arith.constant 1.280000e+02 : f32
    %12 = vector.broadcast %cst_9 : f32 to vector<16x1xf32>
    %13 = arith.divf %11, %12 : vector<16x1xf32>
    %14 = vector.broadcast %13 : vector<16x1xf32> to vector<16x128xf32>
    %15 = arith.subf %7, %14 : vector<16x128xf32>
    %16 = arith.mulf %15, %15 : vector<16x128xf32>
    %cst_10 = arith.constant dense<0.000000e+00> : vector<16xf32>
    %17 = vector.multi_reduction <add>, %16, %cst_10 [1] : vector<16x128xf32> to vector<16xf32>
    %18 = vector.shape_cast %17 : vector<16xf32> to vector<16x1xf32>
    %cst_11 = arith.constant 1.280000e+02 : f32
    %19 = vector.broadcast %cst_11 : f32 to vector<16x1xf32>
    %20 = arith.divf %18, %19 : vector<16x1xf32>
    %21 = vector.broadcast %13 : vector<16x1xf32> to vector<16x128xf32>
    %22 = arith.subf %7, %21 : vector<16x128xf32>
    %cst_12 = arith.constant 9.99999997E-7 : f32
    %23 = vector.broadcast %cst_12 : f32 to vector<16x1xf32>
    %24 = arith.addf %20, %23 : vector<16x1xf32>
    %25 = math.rsqrt %24 : vector<16x1xf32>
    %26 = vector.broadcast %25 : vector<16x1xf32> to vector<16x128xf32>
    %27 = arith.mulf %22, %26 : vector<16x128xf32>
    %28 = vector.broadcast %8 : vector<1x128xf32> to vector<16x128xf32>
    %29 = arith.mulf %27, %28 : vector<16x128xf32>
    %30 = vector.broadcast %9 : vector<1x128xf32> to vector<16x128xf32>
    %31 = arith.addf %29, %30 : vector<16x128xf32>
    %32 = arith.truncf %31 : vector<16x128xf32> to vector<16x128xbf16>
    %c0_13 = arith.constant 0 : index
    %c0_14 = arith.constant 0 : index
    %c0_15 = arith.constant 0 : index
    %33 = vector.load %arg7[%c0_13, %c0_14, %c0_15] : memref<3x128x128xbf16, #tpu.memory_space<vmem>>, vector<1x128x128xbf16>
    %34 = vector.shape_cast %33 : vector<1x128x128xbf16> to vector<128x128xbf16>
    %cst_16 = arith.constant dense<0.000000e+00> : vector<16x128xf32>
    %35 = tpu.matmul %32, %34, %cst_16 {dimension_numbers = #tpu.dot_dimension_numbers<[1], [0], [0], [1], [0, 0, 1, 1], [], []>} : vector<16x128xbf16>, vector<128x128xbf16>, vector<16x128xf32> -> vector<16x128xf32>
    %36 = arith.truncf %35 : vector<16x128xf32> to vector<16x128xbf16>
    %c0_17 = arith.constant 0 : index
    %c0_18 = arith.constant 0 : index
    %37 = vector.load %arg11[%c0_17, %c0_18] : memref<32x128xbf16, #tpu.memory_space<vmem>>, vector<32x128xbf16>
    %c0_19 = arith.constant 0 : index
    %c0_20 = arith.constant 0 : index
    %38 = vector.load %arg12[%c0_19, %c0_20] : memref<32x128xbf16, #tpu.memory_space<vmem>>, vector<32x128xbf16>
    %39 = vector.extract_strided_slice %36 {offsets = [0, 0], sizes = [16, 32], strides = [1, 1]} : vector<16x128xbf16> to vector<16x32xbf16>
    %40 = vector.extract_strided_slice %37 {offsets = [0, 0], sizes = [32, 32], strides = [1, 1]} : vector<32x128xbf16> to vector<32x32xbf16>
    %41 = vector.extract_strided_slice %38 {offsets = [0, 0], sizes = [32, 32], strides = [1, 1]} : vector<32x128xbf16> to vector<32x32xbf16>
    %cst_21 = arith.constant dense<0.000000e+00> : vector<16x32xf32>
    %42 = tpu.matmul %39, %40, %cst_21 {dimension_numbers = #tpu.dot_dimension_numbers<[1], [1], [0], [0], [0, 0, 1, 0], [], []>} : vector<16x32xbf16>, vector<32x32xbf16>, vector<16x32xf32> -> vector<16x32xf32>
    %cst_22 = arith.constant dense<0xFF800000> : vector<16xf32>
    %43 = vector.multi_reduction <maximumf>, %42, %cst_22 [1] : vector<16x32xf32> to vector<16xf32>
    %44 = vector.shape_cast %43 : vector<16xf32> to vector<16x1xf32>
    %45 = vector.broadcast %44 : vector<16x1xf32> to vector<16x32xf32>
    %46 = arith.subf %42, %45 : vector<16x32xf32>
    %47 = math.exp %46 : vector<16x32xf32>
    %cst_23 = arith.constant dense<0.000000e+00> : vector<16xf32>
    %48 = vector.multi_reduction <add>, %47, %cst_23 [1] : vector<16x32xf32> to vector<16xf32>
    %49 = vector.shape_cast %48 : vector<16xf32> to vector<16x1xf32>
    %50 = tpu.reciprocal %49 {approx = true} : vector<16x1xf32> -> vector<16x1xf32>
    %51 = vector.broadcast %50 : vector<16x1xf32> to vector<16x32xf32>
    %52 = arith.mulf %47, %51 : vector<16x32xf32>
    %53 = arith.truncf %52 : vector<16x32xf32> to vector<16x32xbf16>
    %cst_24 = arith.constant dense<0.000000e+00> : vector<16x32xf32>
    %54 = tpu.matmul %53, %41, %cst_24 {dimension_numbers = #tpu.dot_dimension_numbers<[1], [0], [0], [1], [0, 0, 1, 1], [], []>} : vector<16x32xbf16>, vector<32x32xbf16>, vector<16x32xf32> -> vector<16x32xf32>
    %55 = arith.truncf %54 : vector<16x32xf32> to vector<16x32xbf16>
    %c0_25 = arith.constant 0 : index
    %c0_26 = arith.constant 0 : index
    %56 = vector.load %arg8[%c0_25, %c0_26] : memref<128x128xbf16, #tpu.memory_space<vmem>>, vector<32x128xbf16>
    %cst_27 = arith.constant dense<0.000000e+00> : vector<16x128xf32>
    %57 = tpu.matmul %55, %56, %cst_27 {dimension_numbers = #tpu.dot_dimension_numbers<[1], [0], [0], [1], [0, 0, 1, 1], [], []>} : vector<16x32xbf16>, vector<32x128xbf16>, vector<16x128xf32> -> vector<16x128xf32>
    %58 = vector.extract_strided_slice %36 {offsets = [0, 32], sizes = [16, 32], strides = [1, 1]} : vector<16x128xbf16> to vector<16x32xbf16>
    %59 = vector.extract_strided_slice %37 {offsets = [0, 32], sizes = [32, 32], strides = [1, 1]} : vector<32x128xbf16> to vector<32x32xbf16>
    %60 = vector.extract_strided_slice %38 {offsets = [0, 32], sizes = [32, 32], strides = [1, 1]} : vector<32x128xbf16> to vector<32x32xbf16>
    %cst_28 = arith.constant dense<0.000000e+00> : vector<16x32xf32>
    %61 = tpu.matmul %58, %59, %cst_28 {dimension_numbers = #tpu.dot_dimension_numbers<[1], [1], [0], [0], [0, 0, 1, 0], [], []>} : vector<16x32xbf16>, vector<32x32xbf16>, vector<16x32xf32> -> vector<16x32xf32>
    %cst_29 = arith.constant dense<0xFF800000> : vector<16xf32>
    %62 = vector.multi_reduction <maximumf>, %61, %cst_29 [1] : vector<16x32xf32> to vector<16xf32>
    %63 = vector.shape_cast %62 : vector<16xf32> to vector<16x1xf32>
    %64 = vector.broadcast %63 : vector<16x1xf32> to vector<16x32xf32>
    %65 = arith.subf %61, %64 : vector<16x32xf32>
    %66 = math.exp %65 : vector<16x32xf32>
    %cst_30 = arith.constant dense<0.000000e+00> : vector<16xf32>
    %67 = vector.multi_reduction <add>, %66, %cst_30 [1] : vector<16x32xf32> to vector<16xf32>
    %68 = vector.shape_cast %67 : vector<16xf32> to vector<16x1xf32>
    %69 = tpu.reciprocal %68 {approx = true} : vector<16x1xf32> -> vector<16x1xf32>
    %70 = vector.broadcast %69 : vector<16x1xf32> to vector<16x32xf32>
    %71 = arith.mulf %66, %70 : vector<16x32xf32>
    %72 = arith.truncf %71 : vector<16x32xf32> to vector<16x32xbf16>
    %cst_31 = arith.constant dense<0.000000e+00> : vector<16x32xf32>
    %73 = tpu.matmul %72, %60, %cst_31 {dimension_numbers = #tpu.dot_dimension_numbers<[1], [0], [0], [1], [0, 0, 1, 1], [], []>} : vector<16x32xbf16>, vector<32x32xbf16>, vector<16x32xf32> -> vector<16x32xf32>
    %74 = arith.truncf %73 : vector<16x32xf32> to vector<16x32xbf16>
    %c32 = arith.constant 32 : index
    %c0_32 = arith.constant 0 : index
    %75 = vector.load %arg8[%c32, %c0_32] : memref<128x128xbf16, #tpu.memory_space<vmem>>, vector<32x128xbf16>
    %cst_33 = arith.constant dense<0.000000e+00> : vector<16x128xf32>
    %76 = tpu.matmul %74, %75, %cst_33 {dimension_numbers = #tpu.dot_dimension_numbers<[1], [0], [0], [1], [0, 0, 1, 1], [], []>} : vector<16x32xbf16>, vector<32x128xbf16>, vector<16x128xf32> -> vector<16x128xf32>
    %77 = arith.addf %57, %76 : vector<16x128xf32>
    %78 = vector.extract_strided_slice %36 {offsets = [0, 64], sizes = [16, 32], strides = [1, 1]} : vector<16x128xbf16> to vector<16x32xbf16>
    %79 = vector.extract_strided_slice %37 {offsets = [0, 64], sizes = [32, 32], strides = [1, 1]} : vector<32x128xbf16> to vector<32x32xbf16>
    %80 = vector.extract_strided_slice %38 {offsets = [0, 64], sizes = [32, 32], strides = [1, 1]} : vector<32x128xbf16> to vector<32x32xbf16>
    %cst_34 = arith.constant dense<0.000000e+00> : vector<16x32xf32>
    %81 = tpu.matmul %78, %79, %cst_34 {dimension_numbers = #tpu.dot_dimension_numbers<[1], [1], [0], [0], [0, 0, 1, 0], [], []>} : vector<16x32xbf16>, vector<32x32xbf16>, vector<16x32xf32> -> vector<16x32xf32>
    %cst_35 = arith.constant dense<0xFF800000> : vector<16xf32>
    %82 = vector.multi_reduction <maximumf>, %81, %cst_35 [1] : vector<16x32xf32> to vector<16xf32>
    %83 = vector.shape_cast %82 : vector<16xf32> to vector<16x1xf32>
    %84 = vector.broadcast %83 : vector<16x1xf32> to vector<16x32xf32>
    %85 = arith.subf %81, %84 : vector<16x32xf32>
    %86 = math.exp %85 : vector<16x32xf32>
    %cst_36 = arith.constant dense<0.000000e+00> : vector<16xf32>
    %87 = vector.multi_reduction <add>, %86, %cst_36 [1] : vector<16x32xf32> to vector<16xf32>
    %88 = vector.shape_cast %87 : vector<16xf32> to vector<16x1xf32>
    %89 = tpu.reciprocal %88 {approx = true} : vector<16x1xf32> -> vector<16x1xf32>
    %90 = vector.broadcast %89 : vector<16x1xf32> to vector<16x32xf32>
    %91 = arith.mulf %86, %90 : vector<16x32xf32>
    %92 = arith.truncf %91 : vector<16x32xf32> to vector<16x32xbf16>
    %cst_37 = arith.constant dense<0.000000e+00> : vector<16x32xf32>
    %93 = tpu.matmul %92, %80, %cst_37 {dimension_numbers = #tpu.dot_dimension_numbers<[1], [0], [0], [1], [0, 0, 1, 1], [], []>} : vector<16x32xbf16>, vector<32x32xbf16>, vector<16x32xf32> -> vector<16x32xf32>
    %94 = arith.truncf %93 : vector<16x32xf32> to vector<16x32xbf16>
    %c64 = arith.constant 64 : index
    %c0_38 = arith.constant 0 : index
    %95 = vector.load %arg8[%c64, %c0_38] : memref<128x128xbf16, #tpu.memory_space<vmem>>, vector<32x128xbf16>
    %cst_39 = arith.constant dense<0.000000e+00> : vector<16x128xf32>
    %96 = tpu.matmul %94, %95, %cst_39 {dimension_numbers = #tpu.dot_dimension_numbers<[1], [0], [0], [1], [0, 0, 1, 1], [], []>} : vector<16x32xbf16>, vector<32x128xbf16>, vector<16x128xf32> -> vector<16x128xf32>
    %97 = arith.addf %77, %96 : vector<16x128xf32>
    %98 = vector.extract_strided_slice %36 {offsets = [0, 96], sizes = [16, 32], strides = [1, 1]} : vector<16x128xbf16> to vector<16x32xbf16>
    %99 = vector.extract_strided_slice %37 {offsets = [0, 96], sizes = [32, 32], strides = [1, 1]} : vector<32x128xbf16> to vector<32x32xbf16>
    %100 = vector.extract_strided_slice %38 {offsets = [0, 96], sizes = [32, 32], strides = [1, 1]} : vector<32x128xbf16> to vector<32x32xbf16>
    %cst_40 = arith.constant dense<0.000000e+00> : vector<16x32xf32>
    %101 = tpu.matmul %98, %99, %cst_40 {dimension_numbers = #tpu.dot_dimension_numbers<[1], [1], [0], [0], [0, 0, 1, 0], [], []>} : vector<16x32xbf16>, vector<32x32xbf16>, vector<16x32xf32> -> vector<16x32xf32>
    %cst_41 = arith.constant dense<0xFF800000> : vector<16xf32>
    %102 = vector.multi_reduction <maximumf>, %101, %cst_41 [1] : vector<16x32xf32> to vector<16xf32>
    %103 = vector.shape_cast %102 : vector<16xf32> to vector<16x1xf32>
    %104 = vector.broadcast %103 : vector<16x1xf32> to vector<16x32xf32>
    %105 = arith.subf %101, %104 : vector<16x32xf32>
    %106 = math.exp %105 : vector<16x32xf32>
    %cst_42 = arith.constant dense<0.000000e+00> : vector<16xf32>
    %107 = vector.multi_reduction <add>, %106, %cst_42 [1] : vector<16x32xf32> to vector<16xf32>
    %108 = vector.shape_cast %107 : vector<16xf32> to vector<16x1xf32>
    %109 = tpu.reciprocal %108 {approx = true} : vector<16x1xf32> -> vector<16x1xf32>
    %110 = vector.broadcast %109 : vector<16x1xf32> to vector<16x32xf32>
    %111 = arith.mulf %106, %110 : vector<16x32xf32>
    %112 = arith.truncf %111 : vector<16x32xf32> to vector<16x32xbf16>
    %cst_43 = arith.constant dense<0.000000e+00> : vector<16x32xf32>
    %113 = tpu.matmul %112, %100, %cst_43 {dimension_numbers = #tpu.dot_dimension_numbers<[1], [0], [0], [1], [0, 0, 1, 1], [], []>} : vector<16x32xbf16>, vector<32x32xbf16>, vector<16x32xf32> -> vector<16x32xf32>
    %114 = arith.truncf %113 : vector<16x32xf32> to vector<16x32xbf16>
    %c96 = arith.constant 96 : index
    %c0_44 = arith.constant 0 : index
    %115 = vector.load %arg8[%c96, %c0_44] : memref<128x128xbf16, #tpu.memory_space<vmem>>, vector<32x128xbf16>
    %cst_45 = arith.constant dense<0.000000e+00> : vector<16x128xf32>
    %116 = tpu.matmul %114, %115, %cst_45 {dimension_numbers = #tpu.dot_dimension_numbers<[1], [0], [0], [1], [0, 0, 1, 1], [], []>} : vector<16x32xbf16>, vector<32x128xbf16>, vector<16x128xf32> -> vector<16x128xf32>
    %117 = arith.addf %97, %116 : vector<16x128xf32>
    %c0_46 = arith.constant 0 : index
    %c0_47 = arith.constant 0 : index
    %118 = vector.load %arg9[%c0_46, %c0_47] : memref<1x128xf32, #tpu.memory_space<vmem>>, vector<1x128xf32>
    %119 = vector.broadcast %118 : vector<1x128xf32> to vector<16x128xf32>
    %120 = arith.addf %117, %119 : vector<16x128xf32>
    %c0_48 = arith.constant 0 : index
    %c0_49 = arith.constant 0 : index
    %c0_50 = arith.constant 0 : index
    %121 = vector.load %arg10[%c0_48, %c0_49, %c0_50] : memref<1x16x128xf32, #tpu.memory_space<vmem>>, vector<1x16x128xf32>
    %122 = vector.shape_cast %121 : vector<1x16x128xf32> to vector<16x128xf32>
    %123 = vector.shape_cast %120 : vector<16x128xf32> to vector<1x16x128xf32>
    tpu.vector_store %arg10[%c0_48, %c0_49, %c0_50], %123 {strides = array<i32>} : memref<1x16x128xf32, #tpu.memory_space<vmem>>, vector<1x16x128xf32>,
    return
  }
  func.func @transform_0(%arg0: i32, %arg1: i32) -> (i32, i32, i32) {
    %c0_i32 = arith.constant 0 : i32
    %c0_i32_0 = arith.constant 0 : i32
    return %arg0, %arg1, %c0_i32 : i32, i32, i32
  }
  func.func @transform_1(%arg0: i32, %arg1: i32) -> (i32, i32, i32) {
    %c0_i32 = arith.constant 0 : i32
    %c0_i32_0 = arith.constant 0 : i32
    %c0_i32_1 = arith.constant 0 : i32
    return %arg0, %c0_i32, %c0_i32_0 : i32, i32, i32
  }
  func.func @transform_2(%arg0: i32, %arg1: i32) -> (i32, i32, i32) {
    %c0_i32 = arith.constant 0 : i32
    %c0_i32_0 = arith.constant 0 : i32
    return %arg0, %arg1, %c0_i32 : i32, i32, i32
  }
  func.func @transform_3(%arg0: i32, %arg1: i32) -> (i32, i32, i32) {
    %c0_i32 = arith.constant 0 : i32
    %c0_i32_0 = arith.constant 0 : i32
    %c0_i32_1 = arith.constant 0 : i32
    return %arg0, %c0_i32, %c0_i32_0 : i32, i32, i32
  }
  func.func @transform_4(%arg0: i32, %arg1: i32) -> (i32, i32) {
    %c0_i32 = arith.constant 0 : i32
    %c0_i32_0 = arith.constant 0 : i32
    %c0_i32_1 = arith.constant 0 : i32
    return %c0_i32, %c0_i32_0 : i32, i32
  }
  func.func @transform_5(%arg0: i32, %arg1: i32) -> (i32, i32, i32) {
    %c0_i32 = arith.constant 0 : i32
    %c0_i32_0 = arith.constant 0 : i32
    %c0_i32_1 = arith.constant 0 : i32
    %c0_i32_2 = arith.constant 0 : i32
    return %c0_i32, %c0_i32_0, %c0_i32_1 : i32, i32, i32
  }
  func.func @transform_6(%arg0: i32, %arg1: i32) -> (i32, i32) {
    %c0_i32 = arith.constant 0 : i32
    %c0_i32_0 = arith.constant 0 : i32
    %c0_i32_1 = arith.constant 0 : i32
    return %c0_i32, %c0_i32_0 : i32, i32
  }
  func.func @transform_7(%arg0: i32, %arg1: i32) -> (i32, i32) {
    %c0_i32 = arith.constant 0 : i32
    %c0_i32_0 = arith.constant 0 : i32
    %c0_i32_1 = arith.constant 0 : i32
    return %c0_i32, %c0_i32_0 : i32, i32
  }
  func.func @transform_8(%arg0: i32, %arg1: i32) -> (i32, i32, i32) {
    %c0_i32 = arith.constant 0 : i32
    %c0_i32_0 = arith.constant 0 : i32
    return %arg0, %arg1, %c0_i32 : i32, i32, i32
  }
}

</mosaic_0001>

<llo_original>
// kernel: attentive_block_forward.1
$region0: #{attentive_block_forward.1}
  #allocation0 [shape = 'u32[]', space=smem, size = 0x4, offset = 0x4, fixed_abs, tag = 'smem constant byte address 0x4 - core index']
  #allocation1 [shape = 'u32[144,128]{1,0:T(1,128)}', space=vmem, size = 0x12000, scoped, tag = 'internal scratch']
  #allocation2 [shape = 'bf16[32,128]{1,0:T(16,128)(2,1)}', space=vmem, size = 0x2000, scoped, tag = 'scratch operand']
  #allocation3 [shape = 'bf16[32,128]{1,0:T(16,128)(2,1)}', space=vmem, size = 0x2000, scoped, tag = 'scratch operand']
  %s0 = inlined_call_operand.vmem [shape: f32[2,16,128], index: 0, kind: input, shape index: {}]
  %s1 = inlined_call_operand.vmem [shape: f32[2,32,128], index: 1, kind: input, shape index: {}]
  %s2 = inlined_call_operand.vmem [shape: f32[2,16,128], index: 2, kind: input, shape index: {}]
  %s3 = inlined_call_operand.vmem [shape: f32[2,32,128], index: 3, kind: input, shape index: {}]
  %s4 = inlined_call_operand.vmem [shape: f32[6,128], index: 4, kind: input, shape index: {}]
  %s5 = inlined_call_operand.vmem [shape: bf16[3,128,128], index: 5, kind: input, shape index: {}]
  %s6 = inlined_call_operand.vmem [shape: bf16[128,128], index: 6, kind: input, shape index: {}]
  %s7 = inlined_call_operand.vmem [shape: f32[1,128], index: 7, kind: input, shape index: {}]
  %s8 = inlined_call_operand.hbm [shape: f32[2,16,128], index: 8, kind: output, shape index: {}]
  %s9 = sld [smem:[#allocation0]]
  $region69: #{attentive_block_forward.1} parent=0
    _
  %s11 = ssub.s32 1, %s9
  %s12 = scalar_select 0, %s11, %s9
  $region1: #{attentive_block_forward.1} parent=0
    #allocation4 [shape = 'u8[16384]{0}', space=vmem, size = 0x4000, scoped, tag = 'output window, operand 0']
    #allocation5 [shape = 's32[2]{0}', space=sflag, size = 0x8, scoped, tag = 'scoped memory for attentive_block_forward.1']
    %13 = vsyncpa [#allocation5], 0
    %s14 = scalar_lea.sflag [#allocation5], 1
    %15 = vsyncpa %s14, 0
    loop: start=0, step=1, limit=4
    $region2: #{attentive_block_forward.1} parent=1 // loop_pre_header
      _
    $region3: #{attentive_block_forward.1} parent=1 // loop_header
      %s17 = sphi 0, %s21
      %p18 = scmp.ge.s32.totalorder %s17, 4
      %s24 = sphi 0, %s36
      %s25 = sphi 0, %s32
      %s26 = sphi 0, %s24
      %s27 = sphi 0, %s25
      %s28 = sphi 0, %s26
      %s29 = sphi 0, %s27
      %s41 = sphi 0, %s43
      %s44 = sphi 0, %s41
      %s45 = sphi 0, %s44
      %s61 = sphi 0, %s45
      %s67 = sphi 0, %s69
      %s70 = sphi 0, %s67
      %s71 = sphi 0, %s70
      %s87 = sphi 0, %s71
      %s95 = sphi 0, %s97
      %s98 = sphi 0, %s95
      %s99 = sphi 0, %s98
      %s115 = sphi 0, %s99
      %s121 = sphi 0, %s123
      %s124 = sphi 0, %s121
      %s125 = sphi 0, %s124
      %s141 = sphi 0, %s125
      %s145 = sphi 0, %s145
      %s147 = sphi 0, %s145
      %s148 = sphi 0, %s147
      %s162 = sphi 0, %s148
      %s166 = sphi 0, %s166
      %s168 = sphi 0, %s166
      %s169 = sphi 0, %s168
      %s183 = sphi 0, %s169
      %s187 = sphi 0, %s187
      %s189 = sphi 0, %s187
      %s190 = sphi 0, %s189
      %s204 = sphi 0, %s190
      %s208 = sphi 0, %s208
      %s210 = sphi 0, %s208
      %s211 = sphi 0, %s210
      %s225 = sphi 0, %s211
      %s233 = sphi 0, %s235
      %s236 = sphi 0, %s233
      %s237 = sphi 0, %s236
      %s253 = sphi 0, %s237
    $region4: #{attentive_block_forward.1} parent=1 // loop_header_branch
      %20 = sbr.rel (%p18) target = $region8
    $region5: #{attentive_block_forward.1} parent=1 // loop_body
      %s22 = ssub.s32 %s17, 1
      %s23 = ssub.s32 %s17, 2
      %s30 = sadd.s32 1, %s25
      %p31 = scmp.ge.s32.totalorder %s30, 1
      %s32 = scalar_select %p31, 0, %s30
      %s33 = sadd.s32 1, %s24
      %s34 = scalar_select %p31, %s33, %s24
      %p35 = scmp.ge.s32.totalorder %s34, 2
      %s36 = scalar_select %p35, 0, %s34
      %s37 = ssub.s32 %s24, %s36
      %s38 = ssub.s32 %s25, %s32
      %s39 = sor.u32 %s37, %s38
      %p40 = scmp.eq.s32.totalorder %s39, 0
      %s42 = sadd.s32 %s41, 1
      %s43 = scalar_select %p40, %s41, %s42
      %p46 = pneg %p40
      %p47 = scmp.eq.s32.totalorder %s17, 1
      %p48 = por %p46, %p47
      %p49 = scmp.ne.s32.totalorder %s41, %s44
      %p50 = scmp.eq.s32.totalorder %s17, 0
      %p51 = por %p49, %p50
      %p52 = scmp.ne.s32.totalorder %s41, %s44
      %p53 = scmp.eq.s32.totalorder %s22, 1
      %p54 = por %p52, %p53
      %p55 = scmp.ne.s32.totalorder %s44, %s45
      %p56 = scmp.eq.s32.totalorder %s22, 0
      %p57 = por %p55, %p56
      %p58 = scmp.ne.s32.totalorder %s44, %s45
      %p59 = scmp.eq.s32.totalorder %s23, 1
      %p60 = por %p58, %p59
      %p62 = scmp.ne.s32.totalorder %s45, %s61
      %p63 = scmp.eq.s32.totalorder %s23, 0
      %p64 = por %p62, %p63
      %s65 = ssub.s32 %s24, %s36
      %p66 = scmp.eq.s32.totalorder %s65, 0
      %s68 = sadd.s32 %s67, 1
      %s69 = scalar_select %p66, %s67, %s68
      %p72 = pneg %p66
      %p73 = scmp.eq.s32.totalorder %s17, 1
      %p74 = por %p72, %p73
      %p75 = scmp.ne.s32.totalorder %s67, %s70
      %p76 = scmp.eq.s32.totalorder %s17, 0
      %p77 = por %p75, %p76
      %p78 = scmp.ne.s32.totalorder %s67, %s70
      %p79 = scmp.eq.s32.totalorder %s22, 1
      %p80 = por %p78, %p79
      %p81 = scmp.ne.s32.totalorder %s70, %s71
      %p82 = scmp.eq.s32.totalorder %s22, 0
      %p83 = por %p81, %p82
      %p84 = scmp.ne.s32.totalorder %s70, %s71
      %p85 = scmp.eq.s32.totalorder %s23, 1
      %p86 = por %p84, %p85
      %p88 = scmp.ne.s32.totalorder %s71, %s87
      %p89 = scmp.eq.s32.totalorder %s23, 0
      %p90 = por %p88, %p89
      %s91 = ssub.s32 %s24, %s36
      %s92 = ssub.s32 %s25, %s32
      %s93 = sor.u32 %s91, %s92
      %p94 = scmp.eq.s32.totalorder %s93, 0
      %s96 = sadd.s32 %s95, 1
      %s97 = scalar_select %p94, %s95, %s96
      %p100 = pneg %p94
      %p101 = scmp.eq.s32.totalorder %s17, 1
      %p102 = por %p100, %p101
      %p103 = scmp.ne.s32.totalorder %s95, %s98
      %p104 = scmp.eq.s32.totalorder %s17, 0
      %p105 = por %p103, %p104
      %p106 = scmp.ne.s32.totalorder %s95, %s98
      %p107 = scmp.eq.s32.totalorder %s22, 1
      %p108 = por %p106, %p107
      %p109 = scmp.ne.s32.totalorder %s98, %s99
      %p110 = scmp.eq.s32.totalorder %s22, 0
      %p111 = por %p109, %p110
      %p112 = scmp.ne.s32.totalorder %s98, %s99
      %p113 = scmp.eq.s32.totalorder %s23, 1
      %p114 = por %p112, %p113
      %p116 = scmp.ne.s32.totalorder %s99, %s115
      %p117 = scmp.eq.s32.totalorder %s23, 0
      %p118 = por %p116, %p117
      %s119 = ssub.s32 %s24, %s36
      %p120 = scmp.eq.s32.totalorder %s119, 0
      %s122 = sadd.s32 %s121, 1
      %s123 = scalar_select %p120, %s121, %s122
      %p126 = pneg %p120
      %p127 = scmp.eq.s32.totalorder %s17, 1
      %p128 = por %p126, %p127
      %p129 = scmp.ne.s32.totalorder %s121, %s124
      %p130 = scmp.eq.s32.totalorder %s17, 0
      %p131 = por %p129, %p130
      %p132 = scmp.ne.s32.totalorder %s121, %s124
      %p133 = scmp.eq.s32.totalorder %s22, 1
      %p134 = por %p132, %p133
      %p135 = scmp.ne.s32.totalorder %s124, %s125
      %p136 = scmp.eq.s32.totalorder %s22, 0
      %p137 = por %p135, %p136
      %p138 = scmp.ne.s32.totalorder %s124, %s125
      %p139 = scmp.eq.s32.totalorder %s23, 1
      %p140 = por %p138, %p139
      %p142 = scmp.ne.s32.totalorder %s125, %s141
      %p143 = scmp.eq.s32.totalorder %s23, 0
      %p144 = por %p142, %p143
      %s146 = sadd.s32 %s145, 1
      %p149 = scmp.eq.s32.totalorder %s17, 1
      %p150 = scmp.ne.s32.totalorder %s145, %s147
      %p151 = scmp.eq.s32.totalorder %s17, 0
      %p152 = por %p150, %p151
      %p153 = scmp.ne.s32.totalorder %s145, %s147
      %p154 = scmp.eq.s32.totalorder %s22, 1
      %p155 = por %p153, %p154
      %p156 = scmp.ne.s32.totalorder %s147, %s148
      %p157 = scmp.eq.s32.totalorder %s22, 0
      %p158 = por %p156, %p157
      %p159 = scmp.ne.s32.totalorder %s147, %s148
      %p160 = scmp.eq.s32.totalorder %s23, 1
      %p161 = por %p159, %p160
      %p163 = scmp.ne.s32.totalorder %s148, %s162
      %p164 = scmp.eq.s32.totalorder %s23, 0
      %p165 = por %p163, %p164
      %s167 = sadd.s32 %s166, 1
      %p170 = scmp.eq.s32.totalorder %s17, 1
      %p171 = scmp.ne.s32.totalorder %s166, %s168
      %p172 = scmp.eq.s32.totalorder %s17, 0
      %p173 = por %p171, %p172
      %p174 = scmp.ne.s32.totalorder %s166, %s168
      %p175 = scmp.eq.s32.totalorder %s22, 1
      %p176 = por %p174, %p175
      %p177 = scmp.ne.s32.totalorder %s168, %s169
      %p178 = scmp.eq.s32.totalorder %s22, 0
      %p179 = por %p177, %p178
      %p180 = scmp.ne.s32.totalorder %s168, %s169
      %p181 = scmp.eq.s32.totalorder %s23, 1
      %p182 = por %p180, %p181
      %p184 = scmp.ne.s32.totalorder %s169, %s183
      %p185 = scmp.eq.s32.totalorder %s23, 0
      %p186 = por %p184, %p185
      %s188 = sadd.s32 %s187, 1
      %p191 = scmp.eq.s32.totalorder %s17, 1
      %p192 = scmp.ne.s32.totalorder %s187, %s189
      %p193 = scmp.eq.s32.totalorder %s17, 0
      %p194 = por %p192, %p193
      %p195 = scmp.ne.s32.totalorder %s187, %s189
      %p196 = scmp.eq.s32.totalorder %s22, 1
      %p197 = por %p195, %p196
      %p198 = scmp.ne.s32.totalorder %s189, %s190
      %p199 = scmp.eq.s32.totalorder %s22, 0
      %p200 = por %p198, %p199
      %p201 = scmp.ne.s32.totalorder %s189, %s190
      %p202 = scmp.eq.s32.totalorder %s23, 1
      %p203 = por %p201, %p202
      %p205 = scmp.ne.s32.totalorder %s190, %s204
      %p206 = scmp.eq.s32.totalorder %s23, 0
      %p207 = por %p205, %p206
      %s209 = sadd.s32 %s208, 1
      %p212 = scmp.eq.s32.totalorder %s17, 1
      %p213 = scmp.ne.s32.totalorder %s208, %s210
      %p214 = scmp.eq.s32.totalorder %s17, 0
      %p215 = por %p213, %p214
      %p216 = scmp.ne.s32.totalorder %s208, %s210
      %p217 = scmp.eq.s32.totalorder %s22, 1
      %p218 = por %p216, %p217
      %p219 = scmp.ne.s32.totalorder %s210, %s211
      %p220 = scmp.eq.s32.totalorder %s22, 0
      %p221 = por %p219, %p220
      %p222 = scmp.ne.s32.totalorder %s210, %s211
      %p223 = scmp.eq.s32.totalorder %s23, 1
      %p224 = por %p222, %p223
      %p226 = scmp.ne.s32.totalorder %s211, %s225
      %p227 = scmp.eq.s32.totalorder %s23, 0
      %p228 = por %p226, %p227
      %s229 = ssub.s32 %s24, %s36
      %s230 = ssub.s32 %s25, %s32
      %s231 = sor.u32 %s229, %s230
      %p232 = scmp.eq.s32.totalorder %s231, 0
      %s234 = sadd.s32 %s233, 1
      %s235 = scalar_select %p232, %s233, %s234
      %p238 = pneg %p232
      %p239 = scmp.eq.s32.totalorder %s17, 1
      %p240 = por %p238, %p239
      %p241 = scmp.ne.s32.totalorder %s233, %s236
      %p242 = scmp.eq.s32.totalorder %s17, 0
      %p243 = por %p241, %p242
      %p244 = scmp.ne.s32.totalorder %s233, %s236
      %p245 = scmp.eq.s32.totalorder %s22, 1
      %p246 = por %p244, %p245
      %p247 = scmp.ne.s32.totalorder %s236, %s237
      %p248 = scmp.eq.s32.totalorder %s22, 0
      %p249 = por %p247, %p248
      %p250 = scmp.ne.s32.totalorder %s236, %s237
      %p251 = scmp.eq.s32.totalorder %s23, 1
      %p252 = por %p250, %p251
      %p254 = scmp.ne.s32.totalorder %s237, %s253
      %p255 = scmp.eq.s32.totalorder %s23, 0
      %p256 = por %p254, %p255
      %p257 = scmp.le.s32.totalorder 1, %s17
      %p258 = scmp.lt.s32.totalorder %s17, 3
      %p259 = pnand %p257, %p258
      %p260 = pneg %p259
      // Predicated region
      $region9: #{attentive_block_forward.1} parent=5 // pred_check
        _
      $region10: #{attentive_block_forward.1} parent=5 // pred_check_branch
        %262 = sbr.rel (%p259) target = $region12
      $region11: #{attentive_block_forward.1} parent=5 // pred_region
        %s263 = ssub.s32 %s17, 1
        // Predicated region
        $region13: #{attentive_block_forward.1} parent=11 // pred_check
          %p264 = pneg %p158
        $region14: #{attentive_block_forward.1} parent=11 // pred_check_branch
          %266 = sbr.rel (%p264) target = $region16
        $region15: #{attentive_block_forward.1} parent=11 // pred_region
          _
        $region16: #{attentive_block_forward.1} parent=11 // pred_fallthru
          _
        // Predicated region
        $region17: #{attentive_block_forward.1} parent=11 // pred_check
          %p267 = pneg %p179
        $region18: #{attentive_block_forward.1} parent=11 // pred_check_branch
          %269 = sbr.rel (%p267) target = $region20
        $region19: #{attentive_block_forward.1} parent=11 // pred_region
          _
        $region20: #{attentive_block_forward.1} parent=11 // pred_fallthru
          _
        // Predicated region
        $region21: #{attentive_block_forward.1} parent=11 // pred_check
          %p270 = pneg %p200
        $region22: #{attentive_block_forward.1} parent=11 // pred_check_branch
          %272 = sbr.rel (%p270) target = $region24
        $region23: #{attentive_block_forward.1} parent=11 // pred_region
          _
        $region24: #{attentive_block_forward.1} parent=11 // pred_fallthru
          _
        // Predicated region
        $region25: #{attentive_block_forward.1} parent=11 // pred_check
          %p273 = pneg %p221
        $region26: #{attentive_block_forward.1} parent=11 // pred_check_branch
          %275 = sbr.rel (%p273) target = $region28
        $region27: #{attentive_block_forward.1} parent=11 // pred_region
          _
        $region28: #{attentive_block_forward.1} parent=11 // pred_fallthru
          _
      $region12: #{attentive_block_forward.1} parent=5 // pred_fallthru
        _
      %p276 = scmp.lt.s32.totalorder %s17, 2
      // Predicated region
      $region29: #{attentive_block_forward.1} parent=5 // pred_check
        %p277 = pneg %p276
      $region30: #{attentive_block_forward.1} parent=5 // pred_check_branch
        %279 = sbr.rel (%p277) target = $region32
      $region31: #{attentive_block_forward.1} parent=5 // pred_region
        // Predicated region
        $region33: #{attentive_block_forward.1} parent=31 // pred_check
          %p280 = pneg %p51
        $region34: #{attentive_block_forward.1} parent=31 // pred_check_branch
          %282 = sbr.rel (%p280) target = $region36
        $region35: #{attentive_block_forward.1} parent=31 // pred_region
          %s283 = smul.u32 2, %s25
          %p284 = scmp.lt.s32.totalorder %s24, 1
          %s285 = scalar_select %p284, %s24, 1
          %p286 = scmp.lt.s32.totalorder %s283, 1
          %s287 = scalar_select %p286, %s283, 1
          %s288 = smul.addr %s285, 2
          %s289 = sadd.s32 %s287, %s288
          %s290 = smul.addr %s289, 8
          %s291 = scalar_lea.vmem %s0, %s290
          %s292 = smul.u32 2, %s25
        $region36: #{attentive_block_forward.1} parent=31 // pred_fallthru
          _
        // Predicated region
        $region37: #{attentive_block_forward.1} parent=31 // pred_check
          %p293 = pneg %p77
        $region38: #{attentive_block_forward.1} parent=31 // pred_check_branch
          %295 = sbr.rel (%p293) target = $region40
        $region39: #{attentive_block_forward.1} parent=31 // pred_region
          %p296 = scmp.lt.s32.totalorder %s24, 1
          %s297 = scalar_select %p296, %s24, 1
          %s298 = smul.addr %s297, 4
          %s299 = smul.addr %s298, 8
          %s300 = scalar_lea.vmem %s1, %s299
        $region40: #{attentive_block_forward.1} parent=31 // pred_fallthru
          _
        // Predicated region
        $region41: #{attentive_block_forward.1} parent=31 // pred_check
          %p301 = pneg %p105
        $region42: #{attentive_block_forward.1} parent=31 // pred_check_branch
          %303 = sbr.rel (%p301) target = $region44
        $region43: #{attentive_block_forward.1} parent=31 // pred_region
          %s304 = smul.u32 2, %s25
          %p305 = scmp.lt.s32.totalorder %s24, 1
          %s306 = scalar_select %p305, %s24, 1
          %p307 = scmp.lt.s32.totalorder %s304, 1
          %s308 = scalar_select %p307, %s304, 1
          %s309 = smul.addr %s306, 2
          %s310 = sadd.s32 %s308, %s309
          %s311 = smul.addr %s310, 8
          %s312 = scalar_lea.vmem %s2, %s311
          %s313 = smul.u32 2, %s25
        $region44: #{attentive_block_forward.1} parent=31 // pred_fallthru
          _
        // Predicated region
        $region45: #{attentive_block_forward.1} parent=31 // pred_check
          %p314 = pneg %p131
        $region46: #{attentive_block_forward.1} parent=31 // pred_check_branch
          %316 = sbr.rel (%p314) target = $region48
        $region47: #{attentive_block_forward.1} parent=31 // pred_region
          %p317 = scmp.lt.s32.totalorder %s24, 1
          %s318 = scalar_select %p317, %s24, 1
          %s319 = smul.addr %s318, 4
          %s320 = smul.addr %s319, 8
          %s321 = scalar_lea.vmem %s3, %s320
        $region48: #{attentive_block_forward.1} parent=31 // pred_fallthru
          _
      $region32: #{attentive_block_forward.1} parent=5 // pred_fallthru
        _
      %p322 = scmp.le.s32.totalorder 1, %s17
      %p323 = scmp.lt.s32.totalorder %s17, 3
      %p324 = pnand %p322, %p323
      %p325 = pneg %p324
      // Predicated region
      $region49: #{attentive_block_forward.1} parent=5 // pred_check
        _
      $region50: #{attentive_block_forward.1} parent=5 // pred_check_branch
        %327 = sbr.rel (%p324) target = $region52
      $region51: #{attentive_block_forward.1} parent=5 // pred_region
        %s328 = ssub.s32 %s17, 1
        %s329 = smul.u32 2, %s27
        %p330 = scmp.lt.s32.totalorder %s26, 1
        %s331 = scalar_select %p330, %s26, 1
        %p332 = scmp.lt.s32.totalorder %s329, 1
        %s333 = scalar_select %p332, %s329, 1
        %s334 = smul.addr %s331, 2
        %s335 = sadd.s32 %s333, %s334
        %s336 = smul.addr %s335, 8
        %s337 = scalar_lea.vmem %s0, %s336
        %p338 = pneg %p57
        %p339 = pneg %p54
        %p340 = scmp.lt.s32.totalorder %s26, 1
        %s341 = scalar_select %p340, %s26, 1
        %s342 = smul.addr %s341, 4
        %s343 = smul.addr %s342, 8
        %s344 = scalar_lea.vmem %s1, %s343
        %p345 = pneg %p83
        %p346 = pneg %p80
        %s347 = smul.u32 2, %s27
        %p348 = scmp.lt.s32.totalorder %s26, 1
        %s349 = scalar_select %p348, %s26, 1
        %p350 = scmp.lt.s32.totalorder %s347, 1
        %s351 = scalar_select %p350, %s347, 1
        %s352 = smul.addr %s349, 2
        %s353 = sadd.s32 %s351, %s352
        %s354 = smul.addr %s353, 8
        %s355 = scalar_lea.vmem %s2, %s354
        %p356 = pneg %p111
        %p357 = pneg %p108
        %p358 = scmp.lt.s32.totalorder %s26, 1
        %s359 = scalar_select %p358, %s26, 1
        %s360 = smul.addr %s359, 4
        %s361 = smul.addr %s360, 8
        %s362 = scalar_lea.vmem %s3, %s361
        %p363 = pneg %p137
        %p364 = pneg %p134
        %p365 = pneg %p158
        %p366 = pneg %p155
        %p367 = pneg %p179
        %p368 = pneg %p176
        %p369 = pneg %p200
        %p370 = pneg %p197
        %p371 = pneg %p221
        %p372 = pneg %p218
        %p373 = pneg %p249
        %p374 = pneg %p246
        %s375 = sand.u32 %s236, 1
        %s376 = scalar_lea.sflag [#allocation5], %s375
        %s377 = sand.u32 %s236, 1
        %s378 = smul.addr %s377, 16
        %s379 = scalar_lea.vmem [#allocation4], %s378
        %s380 = smul.u32 2, %s27
        %p381 = scmp.lt.s32.totalorder %s26, 1
        %s382 = scalar_select %p381, %s26, 1
        %p383 = scmp.lt.s32.totalorder %s380, 1
        %s384 = scalar_select %p383, %s380, 1
        %s385 = smul.addr %s382, 2
        %s386 = sadd.s32 %s384, %s385
        %s387 = smul.addr %s386, 8
        %s388 = scalar_lea.vmem %s0, %s387
        %s389 = smul.u32 2, %s27
        %p390 = scmp.lt.s32.totalorder %s26, 1
        %s391 = scalar_select %p390, %s26, 1
        %s392 = smul.addr %s391, 4
        %s393 = smul.addr %s392, 8
        %s394 = scalar_lea.vmem %s1, %s393
        %s395 = smul.u32 2, %s27
        %p396 = scmp.lt.s32.totalorder %s26, 1
        %s397 = scalar_select %p396, %s26, 1
        %p398 = scmp.lt.s32.totalorder %s395, 1
        %s399 = scalar_select %p398, %s395, 1
        %s400 = smul.addr %s397, 2
        %s401 = sadd.s32 %s399, %s400
        %s402 = smul.addr %s401, 8
        %s403 = scalar_lea.vmem %s2, %s402
        %s404 = smul.u32 2, %s27
        %p405 = scmp.lt.s32.totalorder %s26, 1
        %s406 = scalar_select %p405, %s26, 1
        %s407 = smul.addr %s406, 4
        %s408 = smul.addr %s407, 8
        %s409 = scalar_lea.vmem %s3, %s408
        %s410 = smul.u32 2, %s27
        %p412 = scmp.eq.s32.totalorder %s27, 0
        // Predicated region
        $region53: #{attentive_block_forward.1} parent=51 // pred_check
          %p413 = pneg %p412
        $region54: #{attentive_block_forward.1} parent=51 // pred_check_branch
          %415 = sbr.rel (%p413) target = $region56
        $region55: #{attentive_block_forward.1} parent=51 // pred_region
          %v416 = vld [vmem:[%s394] sm:$0xff]
          %v417 = vld [vmem:[%s394 + $0x8] sm:$0xff]
          %v418 = vld [vmem:[%s394 + $0x10] sm:$0xff]
          %v419 = vld [vmem:[%s394 + $0x18] sm:$0xff]
          %v420 = vld [vmem:[%s409] sm:$0xff]
          %v421 = vld [vmem:[%s409 + $0x8] sm:$0xff]
          %v422 = vld [vmem:[%s409 + $0x10] sm:$0xff]
          %v423 = vld [vmem:[%s409 + $0x18] sm:$0xff]
          %v424 = vadd.f32 %v416, %v420
          %v425 = vadd.f32 %v417, %v421
          %v426 = vadd.f32 %v418, %v422
          %v427 = vadd.f32 %v419, %v423
          %v428 = vld [vmem:[%s4 + $0x2] sm:$0x1]
          %v429 = vld [vmem:[%s4 + $0x3] sm:$0x1]
          %430 = vadd.xlane.f32.xlu0 %v424
          %v431 = vpop.xlane.xlu0 %430
          %432 = vadd.xlane.f32.xlu0 %v425
          %v433 = vpop.xlane.xlu0 %432
          %434 = vadd.xlane.f32.xlu0 %v426
          %v435 = vpop.xlane.xlu0 %434
          %436 = vadd.xlane.f32.xlu0 %v427
          %v437 = vpop.xlane.xlu0 %436
          %v438 = vrcp.pop 128.0
          %v439 = vmul.f32 %v431, %v438
          %v440 = vmul.f32 %v433, %v438
          %v441 = vmul.f32 %v435, %v438
          %v442 = vmul.f32 %v437, %v438
          %v443 = vsub.f32 %v424, %v439
          %v444 = vsub.f32 %v425, %v440
          %v445 = vsub.f32 %v426, %v441
          %v446 = vsub.f32 %v427, %v442
          %v447 = vmul.f32 %v443, %v443
          %v448 = vmul.f32 %v444, %v444
          %v449 = vmul.f32 %v445, %v445
          %v450 = vmul.f32 %v446, %v446
          %451 = vadd.xlane.f32.xlu0 %v447
          %v452 = vpop.xlane.xlu0 %451
          %453 = vadd.xlane.f32.xlu0 %v448
          %v454 = vpop.xlane.xlu0 %453
          %455 = vadd.xlane.f32.xlu0 %v449
          %v456 = vpop.xlane.xlu0 %455
          %457 = vadd.xlane.f32.xlu0 %v450
          %v458 = vpop.xlane.xlu0 %457
          %v459 = vmul.f32 %v452, %v438
          %v460 = vmul.f32 %v454, %v438
          %v461 = vmul.f32 %v456, %v438
          %v462 = vmul.f32 %v458, %v438
          %v463 = vadd.f32 %v459, 1e-06
          %v464 = vadd.f32 %v460, 1e-06
          %v465 = vadd.f32 %v461, 1e-06
          %v466 = vadd.f32 %v462, 1e-06
          %v467 = vrsqrt.pop %v463
          %v468 = vrsqrt.pop %v464
          %v469 = vrsqrt.pop %v465
          %v470 = vrsqrt.pop %v466
          %v471 = vmul.f32 %v443, %v467
          %v472 = vmul.f32 %v444, %v468
          %v473 = vmul.f32 %v445, %v469
          %v474 = vmul.f32 %v446, %v470
          %v475 = vlaneseq
          %v476 = vshrl.u32 %v475, 7
          %v477 = vsub.s32 0, %v476
          %v478 = vrot.slane %v428, %v477
          %v479 = vmul.f32 %v471, %v478
          %v480 = vmul.f32 %v472, %v478
          %v481 = vmul.f32 %v473, %v478
          %v482 = vmul.f32 %v474, %v478
          %v483 = vlaneseq
          %v484 = vshrl.u32 %v483, 7
          %v485 = vsub.s32 0, %v484
          %v486 = vrot.slane %v429, %v485
          %v487 = vadd.f32 %v479, %v486
          %v488 = vadd.f32 %v480, %v486
          %v489 = vadd.f32 %v481, %v486
          %v490 = vadd.f32 %v482, %v486
          %v491 = vpack.c.bf16 %v488, %v487
          %v492 = vpack.c.bf16 %v490, %v489
          %v493 = vld [vmem:[%s4 + $0x4] sm:$0x1]
          %v494 = vld [vmem:[%s4 + $0x5] sm:$0x1]
          %495 = vadd.xlane.f32.xlu0 %v416
          %v496 = vpop.xlane.xlu0 %495
          %497 = vadd.xlane.f32.xlu0 %v417
          %v498 = vpop.xlane.xlu0 %497
          %499 = vadd.xlane.f32.xlu0 %v418
          %v500 = vpop.xlane.xlu0 %499
          %501 = vadd.xlane.f32.xlu0 %v419
          %v502 = vpop.xlane.xlu0 %501
          %v503 = vmul.f32 %v496, %v438
          %v504 = vmul.f32 %v498, %v438
          %v505 = vmul.f32 %v500, %v438
          %v506 = vmul.f32 %v502, %v438
          %v507 = vsub.f32 %v416, %v503
          %v508 = vsub.f32 %v417, %v504
          %v509 = vsub.f32 %v418, %v505
          %v510 = vsub.f32 %v419, %v506
          %v511 = vmul.f32 %v507, %v507
          %v512 = vmul.f32 %v508, %v508
          %v513 = vmul.f32 %v509, %v509
          %v514 = vmul.f32 %v510, %v510
          %515 = vadd.xlane.f32.xlu0 %v511
          %v516 = vpop.xlane.xlu0 %515
          %517 = vadd.xlane.f32.xlu0 %v512
          %v518 = vpop.xlane.xlu0 %517
          %519 = vadd.xlane.f32.xlu0 %v513
          %v520 = vpop.xlane.xlu0 %519
          %521 = vadd.xlane.f32.xlu0 %v514
          %v522 = vpop.xlane.xlu0 %521
          %v523 = vmul.f32 %v516, %v438
          %v524 = vmul.f32 %v518, %v438
          %v525 = vmul.f32 %v520, %v438
          %v526 = vmul.f32 %v522, %v438
          %v527 = vadd.f32 %v523, 1e-06
          %v528 = vadd.f32 %v524, 1e-06
          %v529 = vadd.f32 %v525, 1e-06
          %v530 = vadd.f32 %v526, 1e-06
          %v531 = vrsqrt.pop %v527
          %v532 = vrsqrt.pop %v528
          %v533 = vrsqrt.pop %v529
          %v534 = vrsqrt.pop %v530
          %v535 = vmul.f32 %v507, %v531
          %v536 = vmul.f32 %v508, %v532
          %v537 = vmul.f32 %v509, %v533
          %v538 = vmul.f32 %v510, %v534
          %v539 = vlaneseq
          %v540 = vshrl.u32 %v539, 7
          %v541 = vsub.s32 0, %v540
          %v542 = vrot.slane %v493, %v541
          %v543 = vmul.f32 %v535, %v542
          %v544 = vmul.f32 %v536, %v542
          %v545 = vmul.f32 %v537, %v542
          %v546 = vmul.f32 %v538, %v542
          %v547 = vlaneseq
          %v548 = vshrl.u32 %v547, 7
          %v549 = vsub.s32 0, %v548
          %v550 = vrot.slane %v494, %v549
          %v551 = vadd.f32 %v543, %v550
          %v552 = vadd.f32 %v544, %v550
          %v553 = vadd.f32 %v545, %v550
          %v554 = vadd.f32 %v546, %v550
          %v555 = vpack.c.bf16 %v552, %v551
          %v556 = vpack.c.bf16 %v554, %v553
          %s557 = scalar_lea.vmem %s5, 64
          %v558 = vld [vmem:[%s557] sm:$0xf]
          %v559 = vld [vmem:[%s557 + $0x4] sm:$0xf]
          %v560 = vld [vmem:[%s557 + $0x8] sm:$0xf]
          %v561 = vld [vmem:[%s557 + $0xc] sm:$0xf]
          %v562 = vld [vmem:[%s557 + $0x10] sm:$0xf]
          %v563 = vld [vmem:[%s557 + $0x14] sm:$0xf]
          %v564 = vld [vmem:[%s557 + $0x18] sm:$0xf]
          %v565 = vld [vmem:[%s557 + $0x1c] sm:$0xf]
          %v566 = vld [vmem:[%s557 + $0x20] sm:$0xf]
          %v567 = vld [vmem:[%s557 + $0x24] sm:$0xf]
          %v568 = vld [vmem:[%s557 + $0x28] sm:$0xf]
          %v569 = vld [vmem:[%s557 + $0x2c] sm:$0xf]
          %v570 = vld [vmem:[%s557 + $0x30] sm:$0xf]
          %v571 = vld [vmem:[%s557 + $0x34] sm:$0xf]
          %v572 = vld [vmem:[%s557 + $0x38] sm:$0xf]
          %v573 = vld [vmem:[%s557 + $0x3c] sm:$0xf]
          %v590 = vunpack.c.l.b16 %v558
          %v591 = vunpack.c.l.b16 %v559
          %v592 = vunpack.c.l.b16 %v560
          %v593 = vunpack.c.l.b16 %v561
          %v594 = vunpack.c.l.b16 %v562
          %v595 = vunpack.c.l.b16 %v563
          %v596 = vunpack.c.l.b16 %v564
          %v597 = vunpack.c.l.b16 %v565
          %v598 = vunpack.c.l.b16 %v566
          %v599 = vunpack.c.l.b16 %v567
          %v600 = vunpack.c.l.b16 %v568
          %v601 = vunpack.c.l.b16 %v569
          %v602 = vunpack.c.l.b16 %v570
          %v603 = vunpack.c.l.b16 %v571
          %v604 = vunpack.c.l.b16 %v572
          %v605 = vunpack.c.l.b16 %v573
          %v606 = vpack.c.b16 %v591, %v590
          %v607 = vpack.c.b16 %v593, %v592
          %v608 = vpack.c.b16 %v595, %v594
          %v609 = vpack.c.b16 %v597, %v596
          %v610 = vpack.c.b16 %v599, %v598
          %v611 = vpack.c.b16 %v601, %v600
          %v612 = vpack.c.b16 %v603, %v602
          %v613 = vpack.c.b16 %v605, %v604
          %622 = vmatprep.subr.bf16.mxu0 0
          %623 = vmatpush1.bf16.msra.mxu0 %v606
          %624 = vmatprep.subr.bf16.mxu0 0
          %625 = vmatpush1.bf16.msra.mxu0 %v607
          %626 = vmatprep.subr.bf16.mxu0 0
          %627 = vmatpush1.bf16.msra.mxu0 %v608
          %628 = vmatprep.subr.bf16.mxu0 0
          %629 = vmatpush1.bf16.msra.mxu0 %v609
          %630 = vmatprep.subr.bf16.mxu0 0
          %631 = vmatpush1.bf16.msra.mxu0 %v610
          %632 = vmatprep.subr.bf16.mxu0 0
          %633 = vmatpush1.bf16.msra.mxu0 %v611
          %634 = vmatprep.subr.bf16.mxu0 0
          %635 = vmatpush1.bf16.msra.mxu0 %v612
          %636 = vmatprep.subr.bf16.mxu0 0
          %637 = vmatpush1.bf16.msra.mxu0 %v613
          %638 = vmatprep.subr.bf16.mxu0 0
          %639 = vmatpush1.bf16.msra.mxu0 0
          %640 = vmatprep.subr.bf16.mxu0 0
          %641 = vmatpush1.bf16.msra.mxu0 0
          %642 = vmatprep.subr.bf16.mxu0 0
          %643 = vmatpush1.bf16.msra.mxu0 0
          %644 = vmatprep.subr.bf16.mxu0 0
          %645 = vmatpush1.bf16.msra.mxu0 0
          %646 = vmatprep.subr.bf16.mxu0 0
          %647 = vmatpush1.bf16.msra.mxu0 0
          %648 = vmatprep.subr.bf16.mxu0 0
          %649 = vmatpush1.bf16.msra.mxu0 0
          %650 = vmatprep.subr.bf16.mxu0 0
          %651 = vmatpush1.bf16.msra.mxu0 0
          %652 = vmatprep.subr.bf16.mxu0 0
          %653 = vmatpush1.bf16.msra.mxu0 0
          %654 = vmatprep.mubr.bf16.mxu0 0
          %655 = vmatmul.mubr.bf16.gmra.mrb[0].mxu0 %v491
          %v656 = vpop.f32.mrb[0].mxu0
          %v657 = vadd.f32 0.0, %v656
          %v658 = vpop.f32.mrb[0].mxu0
          %v659 = vpop.f32.mrb[0].mxu0
          %v660 = vadd.f32 0.0, %v659
          %v661 = vpop.f32.mrb[0].mxu0
          %662 = vmatprep.mubr.bf16.mxu0 0
          %663 = vmatmul.mubr.bf16.gmra.mrb[0].mxu0 %v492
          %v664 = vpop.f32.mrb[0].mxu0
          %v665 = vadd.f32 0.0, %v664
          %v666 = vpop.f32.mrb[0].mxu0
          %v667 = vpop.f32.mrb[0].mxu0
          %v668 = vadd.f32 0.0, %v667
          %v669 = vpop.f32.mrb[0].mxu0
          %670 = vdwg.mxu0
          %v671 = vpack.c.bf16 %v660, %v657
          %v672 = vpack.c.bf16 %v668, %v665
          %673 = vst [vmem:[#allocation2] sm:$0xff] %v671
          %674 = vst [vmem:[#allocation2 + $0x8] sm:$0xff] %v672
          %s675 = scalar_lea.vmem %s5, 128
          %v676 = vld [vmem:[%s675] sm:$0xf]
          %v677 = vld [vmem:[%s675 + $0x4] sm:$0xf]
          %v678 = vld [vmem:[%s675 + $0x8] sm:$0xf]
          %v679 = vld [vmem:[%s675 + $0xc] sm:$0xf]
          %v680 = vld [vmem:[%s675 + $0x10] sm:$0xf]
          %v681 = vld [vmem:[%s675 + $0x14] sm:$0xf]
          %v682 = vld [vmem:[%s675 + $0x18] sm:$0xf]
          %v683 = vld [vmem:[%s675 + $0x1c] sm:$0xf]
          %v684 = vld [vmem:[%s675 + $0x20] sm:$0xf]
          %v685 = vld [vmem:[%s675 + $0x24] sm:$0xf]
          %v686 = vld [vmem:[%s675 + $0x28] sm:$0xf]
          %v687 = vld [vmem:[%s675 + $0x2c] sm:$0xf]
          %v688 = vld [vmem:[%s675 + $0x30] sm:$0xf]
          %v689 = vld [vmem:[%s675 + $0x34] sm:$0xf]
          %v690 = vld [vmem:[%s675 + $0x38] sm:$0xf]
          %v691 = vld [vmem:[%s675 + $0x3c] sm:$0xf]
          %v708 = vunpack.c.l.b16 %v676
          %v709 = vunpack.c.l.b16 %v677
          %v710 = vunpack.c.l.b16 %v678
          %v711 = vunpack.c.l.b16 %v679
          %v712 = vunpack.c.l.b16 %v680
          %v713 = vunpack.c.l.b16 %v681
          %v714 = vunpack.c.l.b16 %v682
          %v715 = vunpack.c.l.b16 %v683
          %v716 = vunpack.c.l.b16 %v684
          %v717 = vunpack.c.l.b16 %v685
          %v718 = vunpack.c.l.b16 %v686
          %v719 = vunpack.c.l.b16 %v687
          %v720 = vunpack.c.l.b16 %v688
          %v721 = vunpack.c.l.b16 %v689
          %v722 = vunpack.c.l.b16 %v690
          %v723 = vunpack.c.l.b16 %v691
          %v724 = vpack.c.b16 %v709, %v708
          %v725 = vpack.c.b16 %v711, %v710
          %v726 = vpack.c.b16 %v713, %v712
          %v727 = vpack.c.b16 %v715, %v714
          %v728 = vpack.c.b16 %v717, %v716
          %v729 = vpack.c.b16 %v719, %v718
          %v730 = vpack.c.b16 %v721, %v720
          %v731 = vpack.c.b16 %v723, %v722
          %740 = vmatprep.subr.bf16.mxu0 0
          %741 = vmatpush1.bf16.msra.mxu0 %v724
          %742 = vmatprep.subr.bf16.mxu0 0
          %743 = vmatpush1.bf16.msra.mxu0 %v725
          %744 = vmatprep.subr.bf16.mxu0 0
          %745 = vmatpush1.bf16.msra.mxu0 %v726
          %746 = vmatprep.subr.bf16.mxu0 0
          %747 = vmatpush1.bf16.msra.mxu0 %v727
          %748 = vmatprep.subr.bf16.mxu0 0
          %749 = vmatpush1.bf16.msra.mxu0 %v728
          %750 = vmatprep.subr.bf16.mxu0 0
          %751 = vmatpush1.bf16.msra.mxu0 %v729
          %752 = vmatprep.subr.bf16.mxu0 0
          %753 = vmatpush1.bf16.msra.mxu0 %v730
          %754 = vmatprep.subr.bf16.mxu0 0
          %755 = vmatpush1.bf16.msra.mxu0 %v731
          %756 = vmatprep.subr.bf16.mxu0 0
          %757 = vmatpush1.bf16.msra.mxu0 0
          %758 = vmatprep.subr.bf16.mxu0 0
          %759 = vmatpush1.bf16.msra.mxu0 0
          %760 = vmatprep.subr.bf16.mxu0 0
          %761 = vmatpush1.bf16.msra.mxu0 0
          %762 = vmatprep.subr.bf16.mxu0 0
          %763 = vmatpush1.bf16.msra.mxu0 0
          %764 = vmatprep.subr.bf16.mxu0 0
          %765 = vmatpush1.bf16.msra.mxu0 0
          %766 = vmatprep.subr.bf16.mxu0 0
          %767 = vmatpush1.bf16.msra.mxu0 0
          %768 = vmatprep.subr.bf16.mxu0 0
          %769 = vmatpush1.bf16.msra.mxu0 0
          %770 = vmatprep.subr.bf16.mxu0 0
          %771 = vmatpush1.bf16.msra.mxu0 0
          %772 = vmatprep.mubr.bf16.mxu0 0
          %773 = vmatmul.mubr.bf16.gmra.mrb[0].mxu0 %v555
          %v774 = vpop.f32.mrb[0].mxu0
          %v775 = vadd.f32 0.0, %v774
          %v776 = vpop.f32.mrb[0].mxu0
          %v777 = vpop.f32.mrb[0].mxu0
          %v778 = vadd.f32 0.0, %v777
          %v779 = vpop.f32.mrb[0].mxu0
          %780 = vmatprep.mubr.bf16.mxu0 0
          %781 = vmatmul.mubr.bf16.gmra.mrb[0].mxu0 %v556
          %v782 = vpop.f32.mrb[0].mxu0
          %v783 = vadd.f32 0.0, %v782
          %v784 = vpop.f32.mrb[0].mxu0
          %v785 = vpop.f32.mrb[0].mxu0
          %v786 = vadd.f32 0.0, %v785
          %v787 = vpop.f32.mrb[0].mxu0
          %788 = vdwg.mxu0
          %v789 = vpack.c.bf16 %v778, %v775
          %v790 = vpack.c.bf16 %v786, %v783
          %791 = vst [vmem:[#allocation3] sm:$0xff] %v789
          %792 = vst [vmem:[#allocation3 + $0x8] sm:$0xff] %v790
        $region56: #{attentive_block_forward.1} parent=51 // pred_fallthru
          _
        %v793 = vld [vmem:[%s388] sm:$0xff]
        %v794 = vld [vmem:[%s388 + $0x8] sm:$0xff]
        %v795 = vld [vmem:[%s403] sm:$0xff]
        %v796 = vld [vmem:[%s403 + $0x8] sm:$0xff]
        %v797 = vadd.f32 %v793, %v795
        %v798 = vadd.f32 %v794, %v796
        %v799 = vld [vmem:[%s4] sm:$0x1]
        %v800 = vld [vmem:[%s4 + $0x1] sm:$0x1]
        %801 = vadd.xlane.f32.xlu0 %v797
        %v802 = vpop.xlane.xlu0 %801
        %803 = vadd.xlane.f32.xlu0 %v798
        %v804 = vpop.xlane.xlu0 %803
        %v805 = vrcp.pop 128.0
        %v806 = vmul.f32 %v802, %v805
        %v807 = vmul.f32 %v804, %v805
        %v808 = vsub.f32 %v797, %v806
        %v809 = vsub.f32 %v798, %v807
        %v810 = vmul.f32 %v808, %v808
        %v811 = vmul.f32 %v809, %v809
        %812 = vadd.xlane.f32.xlu0 %v810
        %v813 = vpop.xlane.xlu0 %812
        %814 = vadd.xlane.f32.xlu0 %v811
        %v815 = vpop.xlane.xlu0 %814
        %v816 = vmul.f32 %v813, %v805
        %v817 = vmul.f32 %v815, %v805
        %v818 = vadd.f32 %v816, 1e-06
        %v819 = vadd.f32 %v817, 1e-06
        %v820 = vrsqrt.pop %v818
        %v821 = vrsqrt.pop %v819
        %v822 = vmul.f32 %v808, %v820
        %v823 = vmul.f32 %v809, %v821
        %v824 = vlaneseq
        %v825 = vshrl.u32 %v824, 7
        %v826 = vsub.s32 0, %v825
        %v827 = vrot.slane %v799, %v826
        %v828 = vmul.f32 %v822, %v827
        %v829 = vmul.f32 %v823, %v827
        %v830 = vlaneseq
        %v831 = vshrl.u32 %v830, 7
        %v832 = vsub.s32 0, %v831
        %v833 = vrot.slane %v800, %v832
        %v834 = vadd.f32 %v828, %v833
        %v835 = vadd.f32 %v829, %v833
        %v836 = vpack.c.bf16 %v835, %v834
        %v837 = vld [vmem:[%s5] sm:$0xf]
        %v838 = vld [vmem:[%s5 + $0x4] sm:$0xf]
        %v839 = vld [vmem:[%s5 + $0x8] sm:$0xf]
        %v840 = vld [vmem:[%s5 + $0xc] sm:$0xf]
        %v841 = vld [vmem:[%s5 + $0x10] sm:$0xf]
        %v842 = vld [vmem:[%s5 + $0x14] sm:$0xf]
        %v843 = vld [vmem:[%s5 + $0x18] sm:$0xf]
        %v844 = vld [vmem:[%s5 + $0x1c] sm:$0xf]
        %v845 = vld [vmem:[%s5 + $0x20] sm:$0xf]
        %v846 = vld [vmem:[%s5 + $0x24] sm:$0xf]
        %v847 = vld [vmem:[%s5 + $0x28] sm:$0xf]
        %v848 = vld [vmem:[%s5 + $0x2c] sm:$0xf]
        %v849 = vld [vmem:[%s5 + $0x30] sm:$0xf]
        %v850 = vld [vmem:[%s5 + $0x34] sm:$0xf]
        %v851 = vld [vmem:[%s5 + $0x38] sm:$0xf]
        %v852 = vld [vmem:[%s5 + $0x3c] sm:$0xf]
        %v869 = vunpack.c.l.b16 %v837
        %v870 = vunpack.c.l.b16 %v838
        %v871 = vunpack.c.l.b16 %v839
        %v872 = vunpack.c.l.b16 %v840
        %v873 = vunpack.c.l.b16 %v841
        %v874 = vunpack.c.l.b16 %v842
        %v875 = vunpack.c.l.b16 %v843
        %v876 = vunpack.c.l.b16 %v844
        %v877 = vunpack.c.l.b16 %v845
        %v878 = vunpack.c.l.b16 %v846
        %v879 = vunpack.c.l.b16 %v847
        %v880 = vunpack.c.l.b16 %v848
        %v881 = vunpack.c.l.b16 %v849
        %v882 = vunpack.c.l.b16 %v850
        %v883 = vunpack.c.l.b16 %v851
        %v884 = vunpack.c.l.b16 %v852
        %v885 = vpack.c.b16 %v870, %v869
        %v886 = vpack.c.b16 %v872, %v871
        %v887 = vpack.c.b16 %v874, %v873
        %v888 = vpack.c.b16 %v876, %v875
        %v889 = vpack.c.b16 %v878, %v877
        %v890 = vpack.c.b16 %v880, %v879
        %v891 = vpack.c.b16 %v882, %v881
        %v892 = vpack.c.b16 %v884, %v883
        %901 = vmatprep.subr.bf16.mxu0 0
        %902 = vmatpush1.bf16.msra.mxu0 %v885
        %903 = vmatprep.subr.bf16.mxu0 0
        %904 = vmatpush1.bf16.msra.mxu0 %v886
        %905 = vmatprep.subr.bf16.mxu0 0
        %906 = vmatpush1.bf16.msra.mxu0 %v887
        %907 = vmatprep.subr.bf16.mxu0 0
        %908 = vmatpush1.bf16.msra.mxu0 %v888
        %909 = vmatprep.subr.bf16.mxu0 0
        %910 = vmatpush1.bf16.msra.mxu0 %v889
        %911 = vmatprep.subr.bf16.mxu0 0
        %912 = vmatpush1.bf16.msra.mxu0 %v890
        %913 = vmatprep.subr.bf16.mxu0 0
        %914 = vmatpush1.bf16.msra.mxu0 %v891
        %915 = vmatprep.subr.bf16.mxu0 0
        %916 = vmatpush1.bf16.msra.mxu0 %v892
        %917 = vmatprep.subr.bf16.mxu0 0
        %918 = vmatpush1.bf16.msra.mxu0 0
        %919 = vmatprep.subr.bf16.mxu0 0
        %920 = vmatpush1.bf16.msra.mxu0 0
        %921 = vmatprep.subr.bf16.mxu0 0
        %922 = vmatpush1.bf16.msra.mxu0 0
        %923 = vmatprep.subr.bf16.mxu0 0
        %924 = vmatpush1.bf16.msra.mxu0 0
        %925 = vmatprep.subr.bf16.mxu0 0
        %926 = vmatpush1.bf16.msra.mxu0 0
        %927 = vmatprep.subr.bf16.mxu0 0
        %928 = vmatpush1.bf16.msra.mxu0 0
        %929 = vmatprep.subr.bf16.mxu0 0
        %930 = vmatpush1.bf16.msra.mxu0 0
        %931 = vmatprep.subr.bf16.mxu0 0
        %932 = vmatpush1.bf16.msra.mxu0 0
        %933 = vmatprep.mubr.bf16.mxu0 0
        %934 = vmatmul.mubr.bf16.gmra.mrb[0].mxu0 %v836
        %v935 = vpop.f32.mrb[0].mxu0
        %v936 = vadd.f32 0.0, %v935
        %v937 = vpop.f32.mrb[0].mxu0
        %v938 = vpop.f32.mrb[0].mxu0
        %v939 = vadd.f32 0.0, %v938
        %v940 = vpop.f32.mrb[0].mxu0
        %941 = vdwg.mxu0
        %v942 = vpack.c.bf16 %v939, %v936
        %v943 = vld [vmem:[#allocation2] sm:$0xff]
        %v944 = vld [vmem:[#allocation2 + $0x8] sm:$0xff]
        %v945 = vld [vmem:[#allocation3] sm:$0xff]
        %v946 = vld [vmem:[#allocation3 + $0x8] sm:$0xff]
        %vm947 = vcmask 261120
        %v949 = vsel %vm947, %v942, 0
        %v952 = vsel %vm947, %v943, 0
        %v955 = vsel %vm947, %v944, 0
        %957 = vmatprep.subr.bf16.mxu0 0
        %958 = vmatpush1.bf16.xpose.msra.mxu0 %v952
        %959 = vmatprep.subr.bf16.mxu0 0
        %960 = vmatpush1.bf16.xpose.msra.mxu0 %v955
        %961 = vmatprep.subr.bf16.mxu0 0
        %962 = vmatpush1.bf16.xpose.msra.mxu0 0
        %963 = vmatprep.subr.bf16.mxu0 0
        %964 = vmatpush1.bf16.xpose.msra.mxu0 0
        %965 = vmatprep.subr.bf16.mxu0 0
        %966 = vmatpush1.bf16.xpose.msra.mxu0 0
        %967 = vmatprep.subr.bf16.mxu0 0
        %968 = vmatpush1.bf16.xpose.msra.mxu0 0
        %969 = vmatprep.subr.bf16.mxu0 0
        %970 = vmatpush1.bf16.xpose.msra.mxu0 0
        %971 = vmatprep.subr.bf16.mxu0 0
        %972 = vmatpush1.bf16.xpose.msra.mxu0 0
        %973 = vmatprep.subr.bf16.mxu0 0
        %974 = vmatpush1.bf16.xpose.msra.mxu0 0
        %975 = vmatprep.subr.bf16.mxu0 0
        %976 = vmatpush1.bf16.xpose.msra.mxu0 0
        %977 = vmatprep.subr.bf16.mxu0 0
        %978 = vmatpush1.bf16.xpose.msra.mxu0 0
        %979 = vmatprep.subr.bf16.mxu0 0
        %980 = vmatpush1.bf16.xpose.msra.mxu0 0
        %981 = vmatprep.subr.bf16.mxu0 0
        %982 = vmatpush1.bf16.xpose.msra.mxu0 0
        %983 = vmatprep.subr.bf16.mxu0 0
        %984 = vmatpush1.bf16.xpose.msra.mxu0 0
        %985 = vmatprep.subr.bf16.mxu0 0
        %986 = vmatpush1.bf16.xpose.msra.mxu0 0
        %987 = vmatprep.subr.bf16.mxu0 0
        %988 = vmatpush1.bf16.xpose.msra.mxu0 0
        %989 = vmatprep.mubr.bf16.mxu0 0
        %990 = vmatmul.mubr.bf16.gmra.mrb[0].mxu0 %v949
        %v991 = vpop.f32.mrb[0].mxu0
        %v992 = vadd.f32 0.0, %v991
        %v993 = vpop.f32.mrb[0].mxu0
        %v994 = vpop.f32.mrb[0].mxu0
        %v995 = vadd.f32 0.0, %v994
        %v996 = vpop.f32.mrb[0].mxu0
        %997 = vdwg.mxu0
        %v998 = vsel %vm947, %v992, -inf
        %999 = vmax.xlane.f32.xlu0 %v998
        %v1000 = vpop.xlane.xlu0 %999
        %v1001 = vsel %vm947, %v995, -inf
        %1002 = vmax.xlane.f32.xlu0 %v1001
        %v1003 = vpop.xlane.xlu0 %1002
        %v1004 = vsub.f32 %v992, %v1000
        %v1005 = vsub.f32 %v995, %v1003
        %v1006 = vmul.f32 %v1004, 1.442695
        %v1007 = vpow.pop %v1006
        %v1008 = vmul.f32 %v1005, 1.442695
        %v1009 = vpow.pop %v1008
        %v1010 = vsel %vm947, %v1007, 0.0
        %1011 = vadd.xlane.f32.xlu0 %v1010
        %v1012 = vpop.xlane.xlu0 %1011
        %v1013 = vsel %vm947, %v1009, 0.0
        %1014 = vadd.xlane.f32.xlu0 %v1013
        %v1015 = vpop.xlane.xlu0 %1014
        %v1016 = vrcp.pop %v1012
        %v1017 = vrcp.pop %v1015
        %v1018 = vmul.f32 %v1007, %v1016
        %v1019 = vmul.f32 %v1009, %v1017
        %v1020 = vpack.c.bf16 %v1019, %v1018
        %v1022 = vsel %vm947, %v1020, 0
        %1024 = vmatprep.subr.bf16.mxu0 0
        %1025 = vmatpush1.bf16.msra.mxu0 %v945
        %1026 = vmatprep.subr.bf16.mxu0 0
        %1027 = vmatpush1.bf16.msra.mxu0 %v946
        %1028 = vmatprep.subr.bf16.mxu0 0
        %1029 = vmatpush1.bf16.msra.mxu0 0
        %1030 = vmatprep.subr.bf16.mxu0 0
        %1031 = vmatpush1.bf16.msra.mxu0 0
        %1032 = vmatprep.subr.bf16.mxu0 0
        %1033 = vmatpush1.bf16.msra.mxu0 0
        %1034 = vmatprep.subr.bf16.mxu0 0
        %1035 = vmatpush1.bf16.msra.mxu0 0
        %1036 = vmatprep.subr.bf16.mxu0 0
        %1037 = vmatpush1.bf16.msra.mxu0 0
        %1038 = vmatprep.subr.bf16.mxu0 0
        %1039 = vmatpush1.bf16.msra.mxu0 0
        %1040 = vmatprep.subr.bf16.mxu0 0
        %1041 = vmatpush1.bf16.msra.mxu0 0
        %1042 = vmatprep.subr.bf16.mxu0 0
        %1043 = vmatpush1.bf16.msra.mxu0 0
        %1044 = vmatprep.subr.bf16.mxu0 0
        %1045 = vmatpush1.bf16.msra.mxu0 0
        %1046 = vmatprep.subr.bf16.mxu0 0
        %1047 = vmatpush1.bf16.msra.mxu0 0
        %1048 = vmatprep.subr.bf16.mxu0 0
        %1049 = vmatpush1.bf16.msra.mxu0 0
        %1050 = vmatprep.subr.bf16.mxu0 0
        %1051 = vmatpush1.bf16.msra.mxu0 0
        %1052 = vmatprep.subr.bf16.mxu0 0
        %1053 = vmatpush1.bf16.msra.mxu0 0
        %1054 = vmatprep.subr.bf16.mxu0 0
        %1055 = vmatpush1.bf16.msra.mxu0 0
        %1056 = vmatprep.mubr.bf16.mxu0 0
        %1057 = vmatmul.mubr.bf16.gmra.mrb[0].mxu0 %v1022
        %v1058 = vpop.f32.mrb[0].mxu0
        %v1059 = vadd.f32 0.0, %v1058
        %v1060 = vpop.f32.mrb[0].mxu0
        %v1061 = vpop.f32.mrb[0].mxu0
        %v1062 = vadd.f32 0.0, %v1061
        %v1063 = vpop.f32.mrb[0].mxu0
        %1064 = vdwg.mxu0
        %v1065 = vpack.c.bf16 %v1062, %v1059
        %v1066 = vld [vmem:[%s6] sm:$0xf]
        %v1067 = vld [vmem:[%s6 + $0x4] sm:$0xf]
        %v1068 = vld [vmem:[%s6 + $0x8] sm:$0xf]
        %v1069 = vld [vmem:[%s6 + $0xc] sm:$0xf]
        %1071 = vrot.lane.b32.xlu0 %v942, 96
        %v1072 = vpop.permute.xlu0 %1071
        %1075 = vrot.lane.b32.xlu0 %v943, 96
        %v1076 = vpop.permute.xlu0 %1075
        %1077 = vrot.lane.b32.xlu0 %v944, 96
        %v1078 = vpop.permute.xlu0 %1077
        %v1080 = vsel %vm947, %v1072, 0
        %v1083 = vsel %vm947, %v1076, 0
        %v1086 = vsel %vm947, %v1078, 0
        %1088 = vmatprep.subr.bf16.mxu0 0
        %1089 = vmatpush1.bf16.xpose.msra.mxu0 %v1083
        %1090 = vmatprep.subr.bf16.mxu0 0
        %1091 = vmatpush1.bf16.xpose.msra.mxu0 %v1086
        %1092 = vmatprep.subr.bf16.mxu0 0
        %1093 = vmatpush1.bf16.xpose.msra.mxu0 0
        %1094 = vmatprep.subr.bf16.mxu0 0
        %1095 = vmatpush1.bf16.xpose.msra.mxu0 0
        %1096 = vmatprep.subr.bf16.mxu0 0
        %1097 = vmatpush1.bf16.xpose.msra.mxu0 0
        %1098 = vmatprep.subr.bf16.mxu0 0
        %1099 = vmatpush1.bf16.xpose.msra.mxu0 0
        %1100 = vmatprep.subr.bf16.mxu0 0
        %1101 = vmatpush1.bf16.xpose.msra.mxu0 0
        %1102 = vmatprep.subr.bf16.mxu0 0
        %1103 = vmatpush1.bf16.xpose.msra.mxu0 0
        %1104 = vmatprep.subr.bf16.mxu0 0
        %1105 = vmatpush1.bf16.xpose.msra.mxu0 0
        %1106 = vmatprep.subr.bf16.mxu0 0
        %1107 = vmatpush1.bf16.xpose.msra.mxu0 0
        %1108 = vmatprep.subr.bf16.mxu0 0
        %1109 = vmatpush1.bf16.xpose.msra.mxu0 0
        %1110 = vmatprep.subr.bf16.mxu0 0
        %1111 = vmatpush1.bf16.xpose.msra.mxu0 0
        %1112 = vmatprep.subr.bf16.mxu0 0
        %1113 = vmatpush1.bf16.xpose.msra.mxu0 0
        %1114 = vmatprep.subr.bf16.mxu0 0
        %1115 = vmatpush1.bf16.xpose.msra.mxu0 0
        %1116 = vmatprep.subr.bf16.mxu0 0
        %1117 = vmatpush1.bf16.xpose.msra.mxu0 0
        %1118 = vmatprep.subr.bf16.mxu0 0
        %1119 = vmatpush1.bf16.xpose.msra.mxu0 0
        %1120 = vmatprep.mubr.bf16.mxu0 0
        %1121 = vmatmul.mubr.bf16.gmra.mrb[0].mxu0 %v1080
        %v1122 = vpop.f32.mrb[0].mxu0
        %v1123 = vadd.f32 0.0, %v1122
        %v1124 = vpop.f32.mrb[0].mxu0
        %v1125 = vpop.f32.mrb[0].mxu0
        %v1126 = vadd.f32 0.0, %v1125
        %v1127 = vpop.f32.mrb[0].mxu0
        %1128 = vdwg.mxu0
        %v1129 = vsel %vm947, %v1123, -inf
        %1130 = vmax.xlane.f32.xlu0 %v1129
        %v1131 = vpop.xlane.xlu0 %1130
        %v1132 = vsel %vm947, %v1126, -inf
        %1133 = vmax.xlane.f32.xlu0 %v1132
        %v1134 = vpop.xlane.xlu0 %1133
        %v1135 = vsub.f32 %v1123, %v1131
        %v1136 = vsub.f32 %v1126, %v1134
        %v1137 = vmul.f32 %v1135, 1.442695
        %v1138 = vpow.pop %v1137
        %v1139 = vmul.f32 %v1136, 1.442695
        %v1140 = vpow.pop %v1139
        %v1141 = vsel %vm947, %v1138, 0.0
        %1142 = vadd.xlane.f32.xlu0 %v1141
        %v1143 = vpop.xlane.xlu0 %1142
        %v1144 = vsel %vm947, %v1140, 0.0
        %1145 = vadd.xlane.f32.xlu0 %v1144
        %v1146 = vpop.xlane.xlu0 %1145
        %v1147 = vrcp.pop %v1143
        %v1148 = vrcp.pop %v1146
        %v1149 = vmul.f32 %v1138, %v1147
        %v1150 = vmul.f32 %v1140, %v1148
        %v1151 = vpack.c.bf16 %v1150, %v1149
        %1154 = vrot.lane.b32.xlu0 %v945, 96
        %v1155 = vpop.permute.xlu0 %1154
        %1156 = vrot.lane.b32.xlu0 %v946, 96
        %v1157 = vpop.permute.xlu0 %1156
        %v1161 = vsel %vm947, %v1151, 0
        %1163 = vmatprep.subr.bf16.mxu0 0
        %1164 = vmatpush1.bf16.msra.mxu0 %v1155
        %1165 = vmatprep.subr.bf16.mxu0 0
        %1166 = vmatpush1.bf16.msra.mxu0 %v1157
        %1167 = vmatprep.subr.bf16.mxu0 0
        %1168 = vmatpush1.bf16.msra.mxu0 0
        %1169 = vmatprep.subr.bf16.mxu0 0
        %1170 = vmatpush1.bf16.msra.mxu0 0
        %1171 = vmatprep.subr.bf16.mxu0 0
        %1172 = vmatpush1.bf16.msra.mxu0 0
        %1173 = vmatprep.subr.bf16.mxu0 0
        %1174 = vmatpush1.bf16.msra.mxu0 0
        %1175 = vmatprep.subr.bf16.mxu0 0
        %1176 = vmatpush1.bf16.msra.mxu0 0
        %1177 = vmatprep.subr.bf16.mxu0 0
        %1178 = vmatpush1.bf16.msra.mxu0 0
        %1179 = vmatprep.subr.bf16.mxu0 0
        %1180 = vmatpush1.bf16.msra.mxu0 0
        %1181 = vmatprep.subr.bf16.mxu0 0
        %1182 = vmatpush1.bf16.msra.mxu0 0
        %1183 = vmatprep.subr.bf16.mxu0 0
        %1184 = vmatpush1.bf16.msra.mxu0 0
        %1185 = vmatprep.subr.bf16.mxu0 0
        %1186 = vmatpush1.bf16.msra.mxu0 0
        %1187 = vmatprep.subr.bf16.mxu0 0
        %1188 = vmatpush1.bf16.msra.mxu0 0
        %1189 = vmatprep.subr.bf16.mxu0 0
        %1190 = vmatpush1.bf16.msra.mxu0 0
        %1191 = vmatprep.subr.bf16.mxu0 0
        %1192 = vmatpush1.bf16.msra.mxu0 0
        %1193 = vmatprep.subr.bf16.mxu0 0
        %1194 = vmatpush1.bf16.msra.mxu0 0
        %1195 = vmatprep.mubr.bf16.mxu0 0
        %1196 = vmatmul.mubr.bf16.gmra.mrb[0].mxu0 %v1161
        %v1197 = vpop.f32.mrb[0].mxu0
        %v1198 = vadd.f32 0.0, %v1197
        %v1199 = vpop.f32.mrb[0].mxu0
        %v1200 = vpop.f32.mrb[0].mxu0
        %v1201 = vadd.f32 0.0, %v1200
        %v1202 = vpop.f32.mrb[0].mxu0
        %1203 = vdwg.mxu0
        %v1204 = vpack.c.bf16 %v1201, %v1198
        %v1205 = vld [vmem:[%s6 + $0x10] sm:$0xf]
        %v1206 = vld [vmem:[%s6 + $0x14] sm:$0xf]
        %v1207 = vld [vmem:[%s6 + $0x18] sm:$0xf]
        %v1208 = vld [vmem:[%s6 + $0x1c] sm:$0xf]
        %v1213 = vunpack.c.l.b16 %v1205
        %v1214 = vunpack.c.l.b16 %v1206
        %v1215 = vunpack.c.l.b16 %v1207
        %v1216 = vunpack.c.l.b16 %v1208
        %v1217 = vpack.c.b16 %v1214, %v1213
        %v1218 = vpack.c.b16 %v1216, %v1215
        %v1222 = vsel %vm947, %v1204, 0
        %1224 = vmatprep.subr.bf16.mxu0 0
        %1225 = vmatpush1.bf16.msra.mxu0 %v1217
        %1226 = vmatprep.subr.bf16.mxu0 0
        %1227 = vmatpush1.bf16.msra.mxu0 %v1218
        %1228 = vmatprep.subr.bf16.mxu0 0
        %1229 = vmatpush1.bf16.msra.mxu0 0
        %1230 = vmatprep.subr.bf16.mxu0 0
        %1231 = vmatpush1.bf16.msra.mxu0 0
        %1232 = vmatprep.subr.bf16.mxu0 0
        %1233 = vmatpush1.bf16.msra.mxu0 0
        %1234 = vmatprep.subr.bf16.mxu0 0
        %1235 = vmatpush1.bf16.msra.mxu0 0
        %1236 = vmatprep.subr.bf16.mxu0 0
        %1237 = vmatpush1.bf16.msra.mxu0 0
        %1238 = vmatprep.subr.bf16.mxu0 0
        %1239 = vmatpush1.bf16.msra.mxu0 0
        %1240 = vmatprep.subr.bf16.mxu0 0
        %1241 = vmatpush1.bf16.msra.mxu0 0
        %1242 = vmatprep.subr.bf16.mxu0 0
        %1243 = vmatpush1.bf16.msra.mxu0 0
        %1244 = vmatprep.subr.bf16.mxu0 0
        %1245 = vmatpush1.bf16.msra.mxu0 0
        %1246 = vmatprep.subr.bf16.mxu0 0
        %1247 = vmatpush1.bf16.msra.mxu0 0
        %1248 = vmatprep.subr.bf16.mxu0 0
        %1249 = vmatpush1.bf16.msra.mxu0 0
        %1250 = vmatprep.subr.bf16.mxu0 0
        %1251 = vmatpush1.bf16.msra.mxu0 0
        %1252 = vmatprep.subr.bf16.mxu0 0
        %1253 = vmatpush1.bf16.msra.mxu0 0
        %1254 = vmatprep.subr.bf16.mxu0 0
        %1255 = vmatpush1.bf16.msra.mxu0 0
        %1256 = vmatprep.mubr.bf16.mxu0 0
        %1257 = vmatmul.mubr.bf16.gmra.mrb[0].mxu0 %v1222
        %v1258 = vpop.f32.mrb[0].mxu0
        %v1259 = vadd.f32 0.0, %v1258
        %v1260 = vpop.f32.mrb[0].mxu0
        %v1261 = vpop.f32.mrb[0].mxu0
        %v1262 = vadd.f32 0.0, %v1261
        %v1263 = vpop.f32.mrb[0].mxu0
        %1264 = vdwg.mxu0
        %v1269 = vunpack.c.l.b16 %v1066
        %v1270 = vunpack.c.l.b16 %v1067
        %v1271 = vunpack.c.l.b16 %v1068
        %v1272 = vunpack.c.l.b16 %v1069
        %v1273 = vpack.c.b16 %v1270, %v1269
        %v1274 = vpack.c.b16 %v1272, %v1271
        %v1278 = vsel %vm947, %v1065, 0
        %1280 = vmatprep.subr.bf16.mxu0 0
        %1281 = vmatpush1.bf16.msra.mxu0 %v1273
        %1282 = vmatprep.subr.bf16.mxu0 0
        %1283 = vmatpush1.bf16.msra.mxu0 %v1274
        %1284 = vmatprep.subr.bf16.mxu0 0
        %1285 = vmatpush1.bf16.msra.mxu0 0
        %1286 = vmatprep.subr.bf16.mxu0 0
        %1287 = vmatpush1.bf16.msra.mxu0 0
        %1288 = vmatprep.subr.bf16.mxu0 0
        %1289 = vmatpush1.bf16.msra.mxu0 0
        %1290 = vmatprep.subr.bf16.mxu0 0
        %1291 = vmatpush1.bf16.msra.mxu0 0
        %1292 = vmatprep.subr.bf16.mxu0 0
        %1293 = vmatpush1.bf16.msra.mxu0 0
        %1294 = vmatprep.subr.bf16.mxu0 0
        %1295 = vmatpush1.bf16.msra.mxu0 0
        %1296 = vmatprep.subr.bf16.mxu0 0
        %1297 = vmatpush1.bf16.msra.mxu0 0
        %1298 = vmatprep.subr.bf16.mxu0 0
        %1299 = vmatpush1.bf16.msra.mxu0 0
        %1300 = vmatprep.subr.bf16.mxu0 0
        %1301 = vmatpush1.bf16.msra.mxu0 0
        %1302 = vmatprep.subr.bf16.mxu0 0
        %1303 = vmatpush1.bf16.msra.mxu0 0
        %1304 = vmatprep.subr.bf16.mxu0 0
        %1305 = vmatpush1.bf16.msra.mxu0 0
        %1306 = vmatprep.subr.bf16.mxu0 0
        %1307 = vmatpush1.bf16.msra.mxu0 0
        %1308 = vmatprep.subr.bf16.mxu0 0
        %1309 = vmatpush1.bf16.msra.mxu0 0
        %1310 = vmatprep.subr.bf16.mxu0 0
        %1311 = vmatpush1.bf16.msra.mxu0 0
        %1312 = vmatprep.mubr.bf16.mxu0 0
        %1313 = vmatmul.mubr.bf16.gmra.mrb[0].mxu0 %v1278
        %v1314 = vpop.f32.mrb[0].mxu0
        %v1315 = vadd.f32 %v1259, %v1314
        %v1316 = vpop.f32.mrb[0].mxu0
        %v1317 = vpop.f32.mrb[0].mxu0
        %v1318 = vadd.f32 %v1262, %v1317
        %v1319 = vpop.f32.mrb[0].mxu0
        %1320 = vdwg.mxu0
        %1321 = vrot.lane.b32.xlu0 %v942, 64
        %v1322 = vpop.permute.xlu0 %1321
        %1323 = vrot.lane.b32.xlu0 %v943, 64
        %v1324 = vpop.permute.xlu0 %1323
        %1325 = vrot.lane.b32.xlu0 %v944, 64
        %v1326 = vpop.permute.xlu0 %1325
        %v1328 = vsel %vm947, %v1322, 0
        %v1331 = vsel %vm947, %v1324, 0
        %v1334 = vsel %vm947, %v1326, 0
        %1336 = vmatprep.subr.bf16.mxu0 0
        %1337 = vmatpush1.bf16.xpose.msra.mxu0 %v1331
        %1338 = vmatprep.subr.bf16.mxu0 0
        %1339 = vmatpush1.bf16.xpose.msra.mxu0 %v1334
        %1340 = vmatprep.subr.bf16.mxu0 0
        %1341 = vmatpush1.bf16.xpose.msra.mxu0 0
        %1342 = vmatprep.subr.bf16.mxu0 0
        %1343 = vmatpush1.bf16.xpose.msra.mxu0 0
        %1344 = vmatprep.subr.bf16.mxu0 0
        %1345 = vmatpush1.bf16.xpose.msra.mxu0 0
        %1346 = vmatprep.subr.bf16.mxu0 0
        %1347 = vmatpush1.bf16.xpose.msra.mxu0 0
        %1348 = vmatprep.subr.bf16.mxu0 0
        %1349 = vmatpush1.bf16.xpose.msra.mxu0 0
        %1350 = vmatprep.subr.bf16.mxu0 0
        %1351 = vmatpush1.bf16.xpose.msra.mxu0 0
        %1352 = vmatprep.subr.bf16.mxu0 0
        %1353 = vmatpush1.bf16.xpose.msra.mxu0 0
        %1354 = vmatprep.subr.bf16.mxu0 0
        %1355 = vmatpush1.bf16.xpose.msra.mxu0 0
        %1356 = vmatprep.subr.bf16.mxu0 0
        %1357 = vmatpush1.bf16.xpose.msra.mxu0 0
        %1358 = vmatprep.subr.bf16.mxu0 0
        %1359 = vmatpush1.bf16.xpose.msra.mxu0 0
        %1360 = vmatprep.subr.bf16.mxu0 0
        %1361 = vmatpush1.bf16.xpose.msra.mxu0 0
        %1362 = vmatprep.subr.bf16.mxu0 0
        %1363 = vmatpush1.bf16.xpose.msra.mxu0 0
        %1364 = vmatprep.subr.bf16.mxu0 0
        %1365 = vmatpush1.bf16.xpose.msra.mxu0 0
        %1366 = vmatprep.subr.bf16.mxu0 0
        %1367 = vmatpush1.bf16.xpose.msra.mxu0 0
        %1368 = vmatprep.mubr.bf16.mxu0 0
        %1369 = vmatmul.mubr.bf16.gmra.mrb[0].mxu0 %v1328
        %v1370 = vpop.f32.mrb[0].mxu0
        %v1371 = vadd.f32 0.0, %v1370
        %v1372 = vpop.f32.mrb[0].mxu0
        %v1373 = vpop.f32.mrb[0].mxu0
        %v1374 = vadd.f32 0.0, %v1373
        %v1375 = vpop.f32.mrb[0].mxu0
        %1376 = vdwg.mxu0
        %v1377 = vsel %vm947, %v1371, -inf
        %1378 = vmax.xlane.f32.xlu0 %v1377
        %v1379 = vpop.xlane.xlu0 %1378
        %v1380 = vsel %vm947, %v1374, -inf
        %1381 = vmax.xlane.f32.xlu0 %v1380
        %v1382 = vpop.xlane.xlu0 %1381
        %v1383 = vsub.f32 %v1371, %v1379
        %v1384 = vsub.f32 %v1374, %v1382
        %v1385 = vmul.f32 %v1383, 1.442695
        %v1386 = vpow.pop %v1385
        %v1387 = vmul.f32 %v1384, 1.442695
        %v1388 = vpow.pop %v1387
        %v1389 = vsel %vm947, %v1386, 0.0
        %1390 = vadd.xlane.f32.xlu0 %v1389
        %v1391 = vpop.xlane.xlu0 %1390
        %v1392 = vsel %vm947, %v1388, 0.0
        %1393 = vadd.xlane.f32.xlu0 %v1392
        %v1394 = vpop.xlane.xlu0 %1393
        %v1395 = vrcp.pop %v1391
        %v1396 = vrcp.pop %v1394
        %v1397 = vmul.f32 %v1386, %v1395
        %v1398 = vmul.f32 %v1388, %v1396
        %v1399 = vpack.c.bf16 %v1398, %v1397
        %1400 = vrot.lane.b32.xlu0 %v945, 64
        %v1401 = vpop.permute.xlu0 %1400
        %1402 = vrot.lane.b32.xlu0 %v946, 64
        %v1403 = vpop.permute.xlu0 %1402
        %v1407 = vsel %vm947, %v1399, 0
        %1409 = vmatprep.subr.bf16.mxu0 0
        %1410 = vmatpush1.bf16.msra.mxu0 %v1401
        %1411 = vmatprep.subr.bf16.mxu0 0
        %1412 = vmatpush1.bf16.msra.mxu0 %v1403
        %1413 = vmatprep.subr.bf16.mxu0 0
        %1414 = vmatpush1.bf16.msra.mxu0 0
        %1415 = vmatprep.subr.bf16.mxu0 0
        %1416 = vmatpush1.bf16.msra.mxu0 0
        %1417 = vmatprep.subr.bf16.mxu0 0
        %1418 = vmatpush1.bf16.msra.mxu0 0
        %1419 = vmatprep.subr.bf16.mxu0 0
        %1420 = vmatpush1.bf16.msra.mxu0 0
        %1421 = vmatprep.subr.bf16.mxu0 0
        %1422 = vmatpush1.bf16.msra.mxu0 0
        %1423 = vmatprep.subr.bf16.mxu0 0
        %1424 = vmatpush1.bf16.msra.mxu0 0
        %1425 = vmatprep.subr.bf16.mxu0 0
        %1426 = vmatpush1.bf16.msra.mxu0 0
        %1427 = vmatprep.subr.bf16.mxu0 0
        %1428 = vmatpush1.bf16.msra.mxu0 0
        %1429 = vmatprep.subr.bf16.mxu0 0
        %1430 = vmatpush1.bf16.msra.mxu0 0
        %1431 = vmatprep.subr.bf16.mxu0 0
        %1432 = vmatpush1.bf16.msra.mxu0 0
        %1433 = vmatprep.subr.bf16.mxu0 0
        %1434 = vmatpush1.bf16.msra.mxu0 0
        %1435 = vmatprep.subr.bf16.mxu0 0
        %1436 = vmatpush1.bf16.msra.mxu0 0
        %1437 = vmatprep.subr.bf16.mxu0 0
        %1438 = vmatpush1.bf16.msra.mxu0 0
        %1439 = vmatprep.subr.bf16.mxu0 0
        %1440 = vmatpush1.bf16.msra.mxu0 0
        %1441 = vmatprep.mubr.bf16.mxu0 0
        %1442 = vmatmul.mubr.bf16.gmra.mrb[0].mxu0 %v1407
        %v1443 = vpop.f32.mrb[0].mxu0
        %v1444 = vadd.f32 0.0, %v1443
        %v1445 = vpop.f32.mrb[0].mxu0
        %v1446 = vpop.f32.mrb[0].mxu0
        %v1447 = vadd.f32 0.0, %v1446
        %v1448 = vpop.f32.mrb[0].mxu0
        %1449 = vdwg.mxu0
        %v1450 = vpack.c.bf16 %v1447, %v1444
        %v1451 = vld [vmem:[%s6 + $0x20] sm:$0xf]
        %v1452 = vld [vmem:[%s6 + $0x24] sm:$0xf]
        %v1453 = vld [vmem:[%s6 + $0x28] sm:$0xf]
        %v1454 = vld [vmem:[%s6 + $0x2c] sm:$0xf]
        %v1459 = vunpack.c.l.b16 %v1451
        %v1460 = vunpack.c.l.b16 %v1452
        %v1461 = vunpack.c.l.b16 %v1453
        %v1462 = vunpack.c.l.b16 %v1454
        %v1463 = vpack.c.b16 %v1460, %v1459
        %v1464 = vpack.c.b16 %v1462, %v1461
        %v1468 = vsel %vm947, %v1450, 0
        %1470 = vmatprep.subr.bf16.mxu0 0
        %1471 = vmatpush1.bf16.msra.mxu0 %v1463
        %1472 = vmatprep.subr.bf16.mxu0 0
        %1473 = vmatpush1.bf16.msra.mxu0 %v1464
        %1474 = vmatprep.subr.bf16.mxu0 0
        %1475 = vmatpush1.bf16.msra.mxu0 0
        %1476 = vmatprep.subr.bf16.mxu0 0
        %1477 = vmatpush1.bf16.msra.mxu0 0
        %1478 = vmatprep.subr.bf16.mxu0 0
        %1479 = vmatpush1.bf16.msra.mxu0 0
        %1480 = vmatprep.subr.bf16.mxu0 0
        %1481 = vmatpush1.bf16.msra.mxu0 0
        %1482 = vmatprep.subr.bf16.mxu0 0
        %1483 = vmatpush1.bf16.msra.mxu0 0
        %1484 = vmatprep.subr.bf16.mxu0 0
        %1485 = vmatpush1.bf16.msra.mxu0 0
        %1486 = vmatprep.subr.bf16.mxu0 0
        %1487 = vmatpush1.bf16.msra.mxu0 0
        %1488 = vmatprep.subr.bf16.mxu0 0
        %1489 = vmatpush1.bf16.msra.mxu0 0
        %1490 = vmatprep.subr.bf16.mxu0 0
        %1491 = vmatpush1.bf16.msra.mxu0 0
        %1492 = vmatprep.subr.bf16.mxu0 0
        %1493 = vmatpush1.bf16.msra.mxu0 0
        %1494 = vmatprep.subr.bf16.mxu0 0
        %1495 = vmatpush1.bf16.msra.mxu0 0
        %1496 = vmatprep.subr.bf16.mxu0 0
        %1497 = vmatpush1.bf16.msra.mxu0 0
        %1498 = vmatprep.subr.bf16.mxu0 0
        %1499 = vmatpush1.bf16.msra.mxu0 0
        %1500 = vmatprep.subr.bf16.mxu0 0
        %1501 = vmatpush1.bf16.msra.mxu0 0
        %1502 = vmatprep.mubr.bf16.mxu0 0
        %1503 = vmatmul.mubr.bf16.gmra.mrb[0].mxu0 %v1468
        %v1504 = vpop.f32.mrb[0].mxu0
        %v1505 = vadd.f32 0.0, %v1504
        %v1506 = vpop.f32.mrb[0].mxu0
        %v1507 = vpop.f32.mrb[0].mxu0
        %v1508 = vadd.f32 0.0, %v1507
        %v1509 = vpop.f32.mrb[0].mxu0
        %1510 = vdwg.mxu0
        %v1511 = vadd.f32 %v1315, %v1505
        %v1512 = vadd.f32 %v1318, %v1508
        %1513 = vrot.lane.b32.xlu0 %v942, 32
        %v1514 = vpop.permute.xlu0 %1513
        %1515 = vrot.lane.b32.xlu0 %v943, 32
        %v1516 = vpop.permute.xlu0 %1515
        %1517 = vrot.lane.b32.xlu0 %v944, 32
        %v1518 = vpop.permute.xlu0 %1517
        %v1520 = vsel %vm947, %v1514, 0
        %v1523 = vsel %vm947, %v1516, 0
        %v1526 = vsel %vm947, %v1518, 0
        %1528 = vmatprep.subr.bf16.mxu0 0
        %1529 = vmatpush1.bf16.xpose.msra.mxu0 %v1523
        %1530 = vmatprep.subr.bf16.mxu0 0
        %1531 = vmatpush1.bf16.xpose.msra.mxu0 %v1526
        %1532 = vmatprep.subr.bf16.mxu0 0
        %1533 = vmatpush1.bf16.xpose.msra.mxu0 0
        %1534 = vmatprep.subr.bf16.mxu0 0
        %1535 = vmatpush1.bf16.xpose.msra.mxu0 0
        %1536 = vmatprep.subr.bf16.mxu0 0
        %1537 = vmatpush1.bf16.xpose.msra.mxu0 0
        %1538 = vmatprep.subr.bf16.mxu0 0
        %1539 = vmatpush1.bf16.xpose.msra.mxu0 0
        %1540 = vmatprep.subr.bf16.mxu0 0
        %1541 = vmatpush1.bf16.xpose.msra.mxu0 0
        %1542 = vmatprep.subr.bf16.mxu0 0
        %1543 = vmatpush1.bf16.xpose.msra.mxu0 0
        %1544 = vmatprep.subr.bf16.mxu0 0
        %1545 = vmatpush1.bf16.xpose.msra.mxu0 0
        %1546 = vmatprep.subr.bf16.mxu0 0
        %1547 = vmatpush1.bf16.xpose.msra.mxu0 0
        %1548 = vmatprep.subr.bf16.mxu0 0
        %1549 = vmatpush1.bf16.xpose.msra.mxu0 0
        %1550 = vmatprep.subr.bf16.mxu0 0
        %1551 = vmatpush1.bf16.xpose.msra.mxu0 0
        %1552 = vmatprep.subr.bf16.mxu0 0
        %1553 = vmatpush1.bf16.xpose.msra.mxu0 0
        %1554 = vmatprep.subr.bf16.mxu0 0
        %1555 = vmatpush1.bf16.xpose.msra.mxu0 0
        %1556 = vmatprep.subr.bf16.mxu0 0
        %1557 = vmatpush1.bf16.xpose.msra.mxu0 0
        %1558 = vmatprep.subr.bf16.mxu0 0
        %1559 = vmatpush1.bf16.xpose.msra.mxu0 0
        %1560 = vmatprep.mubr.bf16.mxu0 0
        %1561 = vmatmul.mubr.bf16.gmra.mrb[0].mxu0 %v1520
        %v1562 = vpop.f32.mrb[0].mxu0
        %v1563 = vadd.f32 0.0, %v1562
        %v1564 = vpop.f32.mrb[0].mxu0
        %v1565 = vpop.f32.mrb[0].mxu0
        %v1566 = vadd.f32 0.0, %v1565
        %v1567 = vpop.f32.mrb[0].mxu0
        %1568 = vdwg.mxu0
        %v1569 = vsel %vm947, %v1563, -inf
        %1570 = vmax.xlane.f32.xlu0 %v1569
        %v1571 = vpop.xlane.xlu0 %1570
        %v1572 = vsel %vm947, %v1566, -inf
        %1573 = vmax.xlane.f32.xlu0 %v1572
        %v1574 = vpop.xlane.xlu0 %1573
        %v1575 = vsub.f32 %v1563, %v1571
        %v1576 = vsub.f32 %v1566, %v1574
        %v1577 = vmul.f32 %v1575, 1.442695
        %v1578 = vpow.pop %v1577
        %v1579 = vmul.f32 %v1576, 1.442695
        %v1580 = vpow.pop %v1579
        %v1581 = vsel %vm947, %v1578, 0.0
        %1582 = vadd.xlane.f32.xlu0 %v1581
        %v1583 = vpop.xlane.xlu0 %1582
        %v1584 = vsel %vm947, %v1580, 0.0
        %1585 = vadd.xlane.f32.xlu0 %v1584
        %v1586 = vpop.xlane.xlu0 %1585
        %v1587 = vrcp.pop %v1583
        %v1588 = vrcp.pop %v1586
        %v1589 = vmul.f32 %v1578, %v1587
        %v1590 = vmul.f32 %v1580, %v1588
        %v1591 = vpack.c.bf16 %v1590, %v1589
        %1592 = vrot.lane.b32.xlu0 %v945, 32
        %v1593 = vpop.permute.xlu0 %1592
        %1594 = vrot.lane.b32.xlu0 %v946, 32
        %v1595 = vpop.permute.xlu0 %1594
        %v1599 = vsel %vm947, %v1591, 0
        %1601 = vmatprep.subr.bf16.mxu0 0
        %1602 = vmatpush1.bf16.msra.mxu0 %v1593
        %1603 = vmatprep.subr.bf16.mxu0 0
        %1604 = vmatpush1.bf16.msra.mxu0 %v1595
        %1605 = vmatprep.subr.bf16.mxu0 0
        %1606 = vmatpush1.bf16.msra.mxu0 0
        %1607 = vmatprep.subr.bf16.mxu0 0
        %1608 = vmatpush1.bf16.msra.mxu0 0
        %1609 = vmatprep.subr.bf16.mxu0 0
        %1610 = vmatpush1.bf16.msra.mxu0 0
        %1611 = vmatprep.subr.bf16.mxu0 0
        %1612 = vmatpush1.bf16.msra.mxu0 0
        %1613 = vmatprep.subr.bf16.mxu0 0
        %1614 = vmatpush1.bf16.msra.mxu0 0
        %1615 = vmatprep.subr.bf16.mxu0 0
        %1616 = vmatpush1.bf16.msra.mxu0 0
        %1617 = vmatprep.subr.bf16.mxu0 0
        %1618 = vmatpush1.bf16.msra.mxu0 0
        %1619 = vmatprep.subr.bf16.mxu0 0
        %1620 = vmatpush1.bf16.msra.mxu0 0
        %1621 = vmatprep.subr.bf16.mxu0 0
        %1622 = vmatpush1.bf16.msra.mxu0 0
        %1623 = vmatprep.subr.bf16.mxu0 0
        %1624 = vmatpush1.bf16.msra.mxu0 0
        %1625 = vmatprep.subr.bf16.mxu0 0
        %1626 = vmatpush1.bf16.msra.mxu0 0
        %1627 = vmatprep.subr.bf16.mxu0 0
        %1628 = vmatpush1.bf16.msra.mxu0 0
        %1629 = vmatprep.subr.bf16.mxu0 0
        %1630 = vmatpush1.bf16.msra.mxu0 0
        %1631 = vmatprep.subr.bf16.mxu0 0
        %1632 = vmatpush1.bf16.msra.mxu0 0
        %1633 = vmatprep.mubr.bf16.mxu0 0
        %1634 = vmatmul.mubr.bf16.gmra.mrb[0].mxu0 %v1599
        %v1635 = vpop.f32.mrb[0].mxu0
        %v1636 = vadd.f32 0.0, %v1635
        %v1637 = vpop.f32.mrb[0].mxu0
        %v1638 = vpop.f32.mrb[0].mxu0
        %v1639 = vadd.f32 0.0, %v1638
        %v1640 = vpop.f32.mrb[0].mxu0
        %1641 = vdwg.mxu0
        %v1642 = vpack.c.bf16 %v1639, %v1636
        %v1643 = vld [vmem:[%s6 + $0x30] sm:$0xf]
        %v1644 = vld [vmem:[%s6 + $0x34] sm:$0xf]
        %v1645 = vld [vmem:[%s6 + $0x38] sm:$0xf]
        %v1646 = vld [vmem:[%s6 + $0x3c] sm:$0xf]
        %v1651 = vunpack.c.l.b16 %v1643
        %v1652 = vunpack.c.l.b16 %v1644
        %v1653 = vunpack.c.l.b16 %v1645
        %v1654 = vunpack.c.l.b16 %v1646
        %v1655 = vpack.c.b16 %v1652, %v1651
        %v1656 = vpack.c.b16 %v1654, %v1653
        %v1660 = vsel %vm947, %v1642, 0
        %1662 = vmatprep.subr.bf16.mxu0 0
        %1663 = vmatpush1.bf16.msra.mxu0 %v1655
        %1664 = vmatprep.subr.bf16.mxu0 0
        %1665 = vmatpush1.bf16.msra.mxu0 %v1656
        %1666 = vmatprep.subr.bf16.mxu0 0
        %1667 = vmatpush1.bf16.msra.mxu0 0
        %1668 = vmatprep.subr.bf16.mxu0 0
        %1669 = vmatpush1.bf16.msra.mxu0 0
        %1670 = vmatprep.subr.bf16.mxu0 0
        %1671 = vmatpush1.bf16.msra.mxu0 0
        %1672 = vmatprep.subr.bf16.mxu0 0
        %1673 = vmatpush1.bf16.msra.mxu0 0
        %1674 = vmatprep.subr.bf16.mxu0 0
        %1675 = vmatpush1.bf16.msra.mxu0 0
        %1676 = vmatprep.subr.bf16.mxu0 0
        %1677 = vmatpush1.bf16.msra.mxu0 0
        %1678 = vmatprep.subr.bf16.mxu0 0
        %1679 = vmatpush1.bf16.msra.mxu0 0
        %1680 = vmatprep.subr.bf16.mxu0 0
        %1681 = vmatpush1.bf16.msra.mxu0 0
        %1682 = vmatprep.subr.bf16.mxu0 0
        %1683 = vmatpush1.bf16.msra.mxu0 0
        %1684 = vmatprep.subr.bf16.mxu0 0
        %1685 = vmatpush1.bf16.msra.mxu0 0
        %1686 = vmatprep.subr.bf16.mxu0 0
        %1687 = vmatpush1.bf16.msra.mxu0 0
        %1688 = vmatprep.subr.bf16.mxu0 0
        %1689 = vmatpush1.bf16.msra.mxu0 0
        %1690 = vmatprep.subr.bf16.mxu0 0
        %1691 = vmatpush1.bf16.msra.mxu0 0
        %1692 = vmatprep.subr.bf16.mxu0 0
        %1693 = vmatpush1.bf16.msra.mxu0 0
        %1694 = vmatprep.mubr.bf16.mxu0 0
        %1695 = vmatmul.mubr.bf16.gmra.mrb[0].mxu0 %v1660
        %v1696 = vpop.f32.mrb[0].mxu0
        %v1697 = vadd.f32 0.0, %v1696
        %v1698 = vpop.f32.mrb[0].mxu0
        %v1699 = vpop.f32.mrb[0].mxu0
        %v1700 = vadd.f32 0.0, %v1699
        %v1701 = vpop.f32.mrb[0].mxu0
        %1702 = vdwg.mxu0
        %v1703 = vadd.f32 %v1511, %v1697
        %v1704 = vadd.f32 %v1512, %v1700
        %v1705 = vld [vmem:[%s7] sm:$0x1]
        %v1707 = vlaneseq
        %v1708 = vshrl.u32 %v1707, 7
        %v1709 = vsub.s32 0, %v1708
        %v1710 = vrot.slane %v1705, %v1709
        %v1712 = vadd.f32 %v1703, %v1710
        %v1713 = vadd.f32 %v1704, %v1710
        %1714 = vst [vmem:[%s379] sm:$0xff] %v1712
        %1715 = vst [vmem:[%s379 + $0x8] sm:$0xff] %v1713
        %s1716 = sand.u32 %s236, 1
        %s1717 = scalar_lea.sflag [#allocation5], %s1716
        %s1718 = sand.u32 %s236, 1
        %s1719 = smul.addr %s1718, 16
        %s1720 = scalar_lea.vmem [#allocation4], %s1719
        // Predicated region
        $region57: #{attentive_block_forward.1} parent=51 // pred_check
          %p1721 = pneg %p246
        $region58: #{attentive_block_forward.1} parent=51 // pred_check_branch
          %1723 = sbr.rel (%p1721) target = $region60
        $region59: #{attentive_block_forward.1} parent=51 // pred_region
          %s1724 = smul.u32 2, %s27
          %s1726 = ssub.s32 256, 256
          %1727 = vsyncadd %s1717, %s1726
          %s1728 = smul.addr %s26, 2
          %s1729 = sadd.s32 %s1724, %s1728
          %s1730 = smul.addr %s1729, 128
          %s1731 = scalar_lea.hbm %s8, %s1730
          %s1732 = sshll.u32 %s1720, 4
          %s1733 = int_to_ptr.vmem [resolvable:$true] %s1732
          %1738 = dma.vmem_to_hbm [thread:$0]  %s1733, 256, %s1731, %s1717, 128, 128, 8
        $region60: #{attentive_block_forward.1} parent=51 // pred_fallthru
          _
      $region52: #{attentive_block_forward.1} parent=5 // pred_fallthru
        _
      %p1739 = scmp.le.s32.totalorder 2, %s17
      // Predicated region
      $region61: #{attentive_block_forward.1} parent=5 // pred_check
        %p1740 = pneg %p1739
      $region62: #{attentive_block_forward.1} parent=5 // pred_check_branch
        %1742 = sbr.rel (%p1740) target = $region64
      $region63: #{attentive_block_forward.1} parent=5 // pred_region
        %s1743 = ssub.s32 %s17, 2
        // Predicated region
        $region65: #{attentive_block_forward.1} parent=63 // pred_check
          %p1744 = pneg %p252
        $region66: #{attentive_block_forward.1} parent=63 // pred_check_branch
          %1746 = sbr.rel (%p1744) target = $region68
        $region67: #{attentive_block_forward.1} parent=63 // pred_region
          %s1747 = sand.u32 %s237, 1
          %s1748 = scalar_lea.sflag [#allocation5], %s1747
          %s1749 = sand.u32 %s237, 1
          %s1750 = smul.addr %s1749, 16
          %s1751 = scalar_lea.vmem [#allocation4], %s1750
          %1752 = dma.done %s1748, 256
        $region68: #{attentive_block_forward.1} parent=63 // pred_fallthru
          _
      $region64: #{attentive_block_forward.1} parent=5 // pred_fallthru
        _
    $region6: #{attentive_block_forward.1} parent=1 // loop_footer
      %s21 = sadd.s32 1, %s17
    $region7: #{attentive_block_forward.1} parent=1 // loop_footer_branch
      %16 = sbr.rel target = $region3
    $region8: #{attentive_block_forward.1} parent=1 // loop_exit
      _
    %1753 = vsyncpa [#allocation5], 1
    %s1754 = scalar_lea.sflag [#allocation5], 1
    %1755 = vsyncpa %s1754, 1

</llo_original>
